<compile_context>
chip_gen: v5e
topology: v5e:2x2
jax: 0.10.0
libtpu: 0.0.40
codegen_flags: <defaults>
</compile_context>

<pallas_src>
import functools

import jax
import jax.numpy as jnp
import numpy as np
from jax.experimental import pallas as pl
from jax.experimental.pallas import tpu as pltpu

# module-level `min_value` constant used (but not defined) in the original file
MIN_VALUE = 1e-5
# TODO(synk): `min_value` and `one_hot_encoder` are free names in the PyTorch
# source; we assume min_value=1e-5 and a standard class-axis one-hot encoder.
# The constructor arg `cof` is unused in forward() and is ignored here.

_NARROW_TARGET_DTYPES = (jnp.int8, jnp.uint8, jnp.int16, jnp.int32)


def _dice_partials_kernel(x_ref, t_ref, out_ref, *, n_classes, spatial_n,
                          block_rows, apply_softmax, approx_reciprocal):
    """One (batch, spatial-tile) grid step.

    Accumulates, per class c, into the resident (1, 3, C, 1, 128) output block:
      [0] sum of p_c where target == c   (raw intersect)
      [1] count of positions target == c (raw one-hot sum)
      [2] sum of p_c                     (z_sum)
    """
    s_idx = pl.program_id(1)

    # Zero the per-batch accumulator once.  The output block index depends
    # only on the batch axis, so it stays resident in VMEM across the whole
    # ("arbitrary") spatial axis and is written back to HBM once per batch.
    @pl.when(s_idx == 0)
    def _():
        out_ref[...] = jnp.zeros_like(out_ref)

    t = t_ref[0].astype(jnp.int32)                      # (R, 128)

    # One fully lane+sublane-packed (R, 128) slab per class: softmax over the
    # class axis is an unrolled elementwise max/add chain (pure VPU, full vreg
    # width even for tiny C, no cross-sublane reductions).
    xs = [x_ref[0, c].astype(jnp.float32) for c in range(n_classes)]
    if apply_softmax:
        m = xs[0]
        for c in range(1, n_classes):
            m = jnp.maximum(m, xs[c])
        es = [jnp.exp(xc - m) for xc in xs]
        den = es[0]
        for c in range(1, n_classes):
            den = den + es[c]
        if approx_reciprocal:
            # EUP vrcp + one Newton step: ~1e-7 relative error in the softmax
            # denominator (not bit-identical to exact division).
            inv = pl.reciprocal(den, approx=True)
            inv = inv * (2.0 - den * inv)
        else:
            inv = 1.0 / den
        ps = [e * inv for e in es]
    else:
        ps = xs

    def accumulate(valid):
        for c in range(n_classes):
            pc = ps[c]
            eq = t == c
            if valid is not None:
                eq = jnp.logical_and(eq, valid)
                pc = jnp.where(valid, pc, 0.0)
            # Lane-wide (1, 128) partial sums; the 128-lane reduce happens in
            # the JAX epilogue, so no per-step cross-lane XLU reductions and
            # no lane-thin stores.
            out_ref[0, 0, c] += jnp.sum(jnp.where(eq, pc, 0.0),
                                        axis=0, keepdims=True)
            out_ref[0, 1, c] += jnp.sum(jnp.where(eq, 1.0, 0.0),
                                        axis=0, keepdims=True)
            out_ref[0, 2, c] += jnp.sum(pc, axis=0, keepdims=True)

    bn = block_rows * 128
    if spatial_n % bn == 0:
        accumulate(None)                 # every tile is full: unmasked path
    else:
        last = pl.num_programs(1) - 1

        @pl.when(s_idx < last)
        def _():
            accumulate(None)

        @pl.when(s_idx == last)
        def _():
            # Mask only the partial last tile.  jnp.where lowers to select on
            # TPU, so NaN/Inf in garbage out-of-bounds rows / pad columns do
            # not propagate into the sums.  (Keep the mask before the sums.)
            row = jax.lax.broadcasted_iota(jnp.int32, (block_rows, 128), 0)
            lane = jax.lax.broadcasted_iota(jnp.int32, (block_rows, 128), 1)
            pos = s_idx * bn + row * 128 + lane
            accumulate(pos < spatial_n)


def _round_up(x, m):
    return ((int(x) + m - 1) // m) * m


def _pick_block_rows(total_rows, n_classes, x_itemsize, t_itemsize,
                     target_bytes=4 << 20, inflight_budget=24 << 20):
    """Largest 32-row-aligned tile with ~target_bytes of logits per step whose
    double-buffered input footprint stays within inflight_budget."""
    logit_row_bytes = 128 * n_classes * x_itemsize
    row_bytes = logit_row_bytes + 128 * t_itemsize
    r = max(int(target_bytes) // max(logit_row_bytes, 1), 32)
    r = min(r, max(int(inflight_budget) // max(2 * row_bytes, 1), 32))
    r = (r // 32) * 32
    return max(32, min(r, _round_up(total_rows, 32)))


def dice_loss(x_nchw, target_bhw, n_classes, weight=None, label_smooth=0.0,
              softmax=True, block_rows=None, approx_reciprocal=True):
    """DiceLoss.forward for NCHW logits and (B, H, W) integer targets."""
    B, C, H, W = x_nchw.shape
    assert C == n_classes, (C, n_classes)
    if label_smooth > 0:
        assert n_classes > 1, "label smoothing needs n_classes > 1"
    if weight is None:
        w = jnp.ones((n_classes,), jnp.float32)
    else:
        w = jnp.asarray(weight, jnp.float32).reshape(-1)
        assert w.shape[0] == n_classes, (w.shape, n_classes)

    S = H * W
    total_rows = pl.cdiv(S, 128)
    S_pad = total_rows * 128

    x = x_nchw.reshape(B, C, S)                                # free reshape
    t = target_bhw.reshape(B, S)
    if t.dtype not in _NARROW_TARGET_DTYPES:
        # e.g. int64 targets from a PyTorch pipeline; supported narrow dtypes
        # pass straight through to keep the target HBM stream small.
        t = t.astype(jnp.int32)

    if S_pad != S:
        # TODO(synk): ragged H*W costs one extra HBM pass to pad the spatial
        # axis to a multiple of 128; typical segmentation shapes are aligned.
        x = jnp.pad(x, ((0, 0), (0, 0), (0, S_pad - S)))
        t = jnp.pad(t, ((0, 0), (0, S_pad - S)))

    # Spatial packed onto (sublane, lane): full vreg utilization for any C.
    x = x.reshape(B, C, total_rows, 128)
    t = t.reshape(B, total_rows, 128)

    x_item = jnp.dtype(x.dtype).itemsize
    t_item = jnp.dtype(t.dtype).itemsize
    if block_rows is None:
        block_rows = _pick_block_rows(total_rows, C, x_item, t_item)
    else:
        block_rows = max(32, (int(block_rows) // 32) * 32)
        block_rows = min(block_rows, _round_up(total_rows, 32))
    T = pl.cdiv(total_rows, block_rows)

    step_in_bytes = block_rows * 128 * (C * x_item + t_item)
    vmem_limit = int(min(32 << 20, max(16 << 20, 3 * step_in_bytes + (2 << 20))))

    kernel = functools.partial(
        _dice_partials_kernel,
        n_classes=C,
        spatial_n=S,
        block_rows=block_rows,
        apply_softmax=bool(softmax),
        approx_reciprocal=bool(approx_reciprocal),
    )

    parts = pl.pallas_call(
        kernel,
        out_shape=jax.ShapeDtypeStruct((B, 3, C, 1, 128), jnp.float32),
        grid_spec=pltpu.PrefetchScalarGridSpec(
            num_scalar_prefetch=0,
            grid=(B, T),
            in_specs=[
                pl.BlockSpec((1, C, block_rows, 128),
                             lambda b, s: (b, 0, s, 0)),      # logits
                pl.BlockSpec((1, block_rows, 128),
                             lambda b, s: (b, s, 0)),         # targets
            ],
            out_specs=pl.BlockSpec((1, 3, C, 1, 128),
                                   lambda b, s: (b, 0, 0, 0, 0)),
        ),
        compiler_params=pltpu.CompilerParams(
            dimension_semantics=("parallel", "arbitrary"),
            vmem_limit_bytes=vmem_limit),
    )(x, t)

    # Tiny epilogue in plain JAX: 128-lane reduce, label-smoothing affine map,
    # dice ratio and weighted mean.
    sums = jnp.sum(parts, axis=(0, 3, 4))                     # (3, C)
    inter_raw, count, z_sum = sums[0], sums[1], sums[2]
    if label_smooth > 0:
        min_p = label_smooth / (n_classes - 1)
        coef = 1.0 - label_smooth - min_p
        intersect = coef * inter_raw + min_p * z_sum
        y_sum = coef * count + min_p * (B * S)
    else:
        intersect, y_sum = inter_raw, count
    dice = (2.0 * intersect + MIN_VALUE) / (z_sum + y_sum + MIN_VALUE)
    return 1.0 - jnp.mean(w * dice)


def _ref_dice_loss(x_nchw, target_bhw, n_classes, weight=None,
                   label_smooth=0.0, softmax=True):
    B, C, H, W = x_nchw.shape
    x = x_nchw.transpose(0, 2, 3, 1).reshape(-1, C).astype(jnp.float32)
    t = target_bhw.reshape(-1)
    p = jax.nn.softmax(x, axis=1) if softmax else x
    onehot = jax.nn.one_hot(t, n_classes, dtype=jnp.float32)
    if label_smooth > 0:
        min_p = label_smooth / (n_classes - 1)
        onehot = onehot * (1.0 - label_smooth) + (1.0 - onehot) * min_p
    if weight is None:
        weight = jnp.ones((n_classes,), jnp.float32)
    else:
        weight = jnp.asarray(weight, jnp.float32).reshape(-1)
    intersect = jnp.sum(p * onehot, axis=0)
    y_sum = jnp.sum(onehot, axis=0)
    z_sum = jnp.sum(p, axis=0)
    dice = (2.0 * intersect + MIN_VALUE) / (z_sum + y_sum + MIN_VALUE)
    return 1.0 - jnp.mean(weight * dice)


if __name__ == "__main__":
    key = jax.random.PRNGKey(0)
    k1, k2, k3, k4, k5, k6, k7, k8 = jax.random.split(key, 8)
    B, C = 2, 4

    # --- test 1: small aligned spatial extent (single, partially-filled tile),
    #             label smoothing, default tile size ----------------------------
    x1 = jax.random.normal(k1, (B, C, 16, 16), dtype=jnp.float32)
    t1 = jax.random.randint(k2, (B, 16, 16), 0, C, dtype=jnp.int32)
    loss1 = jax.block_until_ready(dice_loss(x1, t1, C, label_smooth=0.1))
    ref1 = _ref_dice_loss(x1, t1, C, label_smooth=0.1)
    np.testing.assert_allclose(np.asarray(loss1), np.asarray(ref1),
                               rtol=5e-5, atol=5e-5)

    # --- test 2: ragged spatial extent (wrapper pad + masked last tile),
    #             multi-step accumulation, non-uniform class weights ------------
    x2 = jax.random.normal(k3, (B, C, 72, 72), dtype=jnp.float32)   # S = 5184
    t2 = jax.random.randint(k4, (B, 72, 72), 0, C, dtype=jnp.int32)
    wgt = jnp.array([0.5, 1.0, 1.5, 2.0], jnp.float32)
    loss2 = jax.block_until_ready(
        dice_loss(x2, t2, C, weight=wgt, block_rows=32))
    ref2 = _ref_dice_loss(x2, t2, C, weight=wgt)
    np.testing.assert_allclose(np.asarray(loss2), np.asarray(ref2),
                               rtol=5e-5, atol=5e-5)

    # --- test 3: softmax=False (inputs already probabilities), smoothing,
    #             multi-step fully-unmasked path --------------------------------
    x3 = jax.random.normal(k5, (B, C, 64, 128), dtype=jnp.float32)  # S = 8192
    t3 = jax.random.randint(k6, (B, 64, 128), 0, C, dtype=jnp.int32)
    p3 = jax.nn.softmax(x3, axis=1)
    loss3 = jax.block_until_ready(
        dice_loss(p3, t3, C, label_smooth=0.05, softmax=False, block_rows=32))
    ref3 = _ref_dice_loss(p3, t3, C, label_smooth=0.05, softmax=False)
    np.testing.assert_allclose(np.asarray(loss3), np.asarray(ref3),
                               rtol=5e-5, atol=5e-5)

    # --- test 4: bf16 logits stream (stays bf16 through the DMA), 4 tiles ------
    x4 = jax.random.normal(k7, (B, C, 128, 128), dtype=jnp.bfloat16)
    t4 = jax.random.randint(k8, (B, 128, 128), 0, C, dtype=jnp.int32)
    loss4 = jax.block_until_ready(
        dice_loss(x4, t4, C, label_smooth=0.1, block_rows=32))
    ref4 = _ref_dice_loss(x4, t4, C, label_smooth=0.1)
    np.testing.assert_allclose(np.asarray(loss4), np.asarray(ref4),
                               rtol=1e-4, atol=1e-4)

    print("KERNEL_OK")
</pallas_src>

<mosaic_0001>
module attributes {stable_mosaic.version = 11 : i64} {
  func.func @_dice_partials_kernel(%arg0: i32, %arg1: i32, %arg2: memref<1x4x32x128xf32, #tpu.memory_space<vmem>>, %arg3: memref<1x32x128xi32, #tpu.memory_space<vmem>>, %arg4: memref<1x3x4x1x128xf32, #tpu.memory_space<vmem>>) attributes {dimension_semantics = [#tpu.dimension_semantics<parallel>, #tpu.dimension_semantics<arbitrary>], iteration_bounds = array<i64: 2, 1>, scalar_prefetch = 0 : i64, scratch_operands = 0 : i64, tpu.core_type = #tpu.core_type<tc>, window_params = [{transform_indices = @transform_0, window_bounds = array<i64: 1, 4, 32, 128>}, {transform_indices = @transform_1, window_bounds = array<i64: 1, 32, 128>}, {transform_indices = @transform_2, window_bounds = array<i64: 1, 3, 4, 1, 128>}]} {
    %c0_i32 = arith.constant 0 : i32
    %0 = arith.cmpi eq, %arg1, %c0_i32 : i32
    %1 = arith.extui %0 : i1 to i32
    %c0_i32_0 = arith.constant 0 : i32
    %2 = arith.cmpi ne, %1, %c0_i32_0 : i32
    scf.if %2 {
      %cst_20 = arith.constant 0.000000e+00 : f32
      %42 = vector.broadcast %cst_20 : f32 to vector<1x3x4x1x128xf32>
      %c0_21 = arith.constant 0 : index
      %c0_22 = arith.constant 0 : index
      %c0_23 = arith.constant 0 : index
      %c0_24 = arith.constant 0 : index
      %c0_25 = arith.constant 0 : index
      %43 = vector.load %arg4[%c0_21, %c0_22, %c0_23, %c0_24, %c0_25] : memref<1x3x4x1x128xf32, #tpu.memory_space<vmem>>, vector<1x3x4x1x128xf32>
      tpu.vector_store %arg4[%c0_21, %c0_22, %c0_23, %c0_24, %c0_25], %42 {strides = array<i32>} : memref<1x3x4x1x128xf32, #tpu.memory_space<vmem>>, vector<1x3x4x1x128xf32>,
    } else {
    }
    %c0 = arith.constant 0 : index
    %c0_1 = arith.constant 0 : index
    %c0_2 = arith.constant 0 : index
    %3 = vector.load %arg3[%c0, %c0_1, %c0_2] : memref<1x32x128xi32, #tpu.memory_space<vmem>>, vector<1x32x128xi32>
    %4 = vector.shape_cast %3 : vector<1x32x128xi32> to vector<32x128xi32>
    %c0_3 = arith.constant 0 : index
    %c0_4 = arith.constant 0 : index
    %c0_5 = arith.constant 0 : index
    %c0_6 = arith.constant 0 : index
    %5 = vector.load %arg2[%c0_3, %c0_4, %c0_5, %c0_6] : memref<1x4x32x128xf32, #tpu.memory_space<vmem>>, vector<1x1x32x128xf32>
    %6 = vector.shape_cast %5 : vector<1x1x32x128xf32> to vector<32x128xf32>
    %c0_7 = arith.constant 0 : index
    %c1 = arith.constant 1 : index
    %c0_8 = arith.constant 0 : index
    %c0_9 = arith.constant 0 : index
    %7 = vector.load %arg2[%c0_7, %c1, %c0_8, %c0_9] : memref<1x4x32x128xf32, #tpu.memory_space<vmem>>, vector<1x1x32x128xf32>
    %8 = vector.shape_cast %7 : vector<1x1x32x128xf32> to vector<32x128xf32>
    %c0_10 = arith.constant 0 : index
    %c2 = arith.constant 2 : index
    %c0_11 = arith.constant 0 : index
    %c0_12 = arith.constant 0 : index
    %9 = vector.load %arg2[%c0_10, %c2, %c0_11, %c0_12] : memref<1x4x32x128xf32, #tpu.memory_space<vmem>>, vector<1x1x32x128xf32>
    %10 = vector.shape_cast %9 : vector<1x1x32x128xf32> to vector<32x128xf32>
    %c0_13 = arith.constant 0 : index
    %c3 = arith.constant 3 : index
    %c0_14 = arith.constant 0 : index
    %c0_15 = arith.constant 0 : index
    %11 = vector.load %arg2[%c0_13, %c3, %c0_14, %c0_15] : memref<1x4x32x128xf32, #tpu.memory_space<vmem>>, vector<1x1x32x128xf32>
    %12 = vector.shape_cast %11 : vector<1x1x32x128xf32> to vector<32x128xf32>
    %13 = arith.maximumf %6, %8 : vector<32x128xf32>
    %14 = arith.maximumf %13, %10 : vector<32x128xf32>
    %15 = arith.maximumf %14, %12 : vector<32x128xf32>
    %16 = arith.subf %6, %15 : vector<32x128xf32>
    %17 = math.exp %16 : vector<32x128xf32>
    %18 = arith.subf %8, %15 : vector<32x128xf32>
    %19 = math.exp %18 : vector<32x128xf32>
    %20 = arith.subf %10, %15 : vector<32x128xf32>
    %21 = math.exp %20 : vector<32x128xf32>
    %22 = arith.subf %12, %15 : vector<32x128xf32>
    %23 = math.exp %22 : vector<32x128xf32>
    %24 = arith.addf %17, %19 : vector<32x128xf32>
    %25 = arith.addf %24, %21 : vector<32x128xf32>
    %26 = arith.addf %25, %23 : vector<32x128xf32>
    %27 = tpu.reciprocal %26 {approx = true} : vector<32x128xf32> -> vector<32x128xf32>
    %28 = arith.mulf %26, %27 : vector<32x128xf32>
    %cst = arith.constant 2.000000e+00 : f32
    %29 = vector.broadcast %cst : f32 to vector<32x128xf32>
    %30 = arith.subf %29, %28 : vector<32x128xf32>
    %31 = arith.mulf %27, %30 : vector<32x128xf32>
    %32 = arith.mulf %17, %31 : vector<32x128xf32>
    %33 = arith.mulf %19, %31 : vector<32x128xf32>
    %34 = arith.mulf %21, %31 : vector<32x128xf32>
    %35 = arith.mulf %23, %31 : vector<32x128xf32>
    %c0_i32_16 = arith.constant 0 : i32
    %36 = arith.cmpi slt, %arg1, %c0_i32_16 : i32
    %37 = arith.extui %36 : i1 to i32
    %c0_i32_17 = arith.constant 0 : i32
    %38 = arith.cmpi ne, %37, %c0_i32_17 : i32
    scf.if %38 {
      %c0_i32_20 = arith.constant 0 : i32
      %42 = vector.broadcast %c0_i32_20 : i32 to vector<32x128xi32>
      %43 = arith.cmpi eq, %4, %42 : vector<32x128xi32>
      %c0_21 = arith.constant 0 : index
      %c0_22 = arith.constant 0 : index
      %c0_23 = arith.constant 0 : index
      %c0_24 = arith.constant 0 : index
      %c0_25 = arith.constant 0 : index
      %44 = vector.load %arg4[%c0_21, %c0_22, %c0_23, %c0_24, %c0_25] : memref<1x3x4x1x128xf32, #tpu.memory_space<vmem>>, vector<1x1x1x1x128xf32>
      %45 = vector.shape_cast %44 : vector<1x1x1x1x128xf32> to vector<1x128xf32>
      %cst_26 = arith.constant 0.000000e+00 : f32
      %46 = vector.broadcast %cst_26 : f32 to vector<32x128xf32>
      %47 = arith.select %43, %32, %46 : vector<32x128xi1>, vector<32x128xf32>
      %cst_27 = arith.constant dense<0.000000e+00> : vector<128xf32>
      %48 = vector.multi_reduction <add>, %47, %cst_27 [0] : vector<32x128xf32> to vector<128xf32>
      %49 = vector.shape_cast %48 : vector<128xf32> to vector<1x128xf32>
      %50 = arith.addf %45, %49 : vector<1x128xf32>
      %c0_28 = arith.constant 0 : index
      %c0_29 = arith.constant 0 : index
      %c0_30 = arith.constant 0 : index
      %c0_31 = arith.constant 0 : index
      %c0_32 = arith.constant 0 : index
      %51 = vector.load %arg4[%c0_28, %c0_29, %c0_30, %c0_31, %c0_32] : memref<1x3x4x1x128xf32, #tpu.memory_space<vmem>>, vector<1x1x1x1x128xf32>
      %52 = vector.shape_cast %51 : vector<1x1x1x1x128xf32> to vector<1x128xf32>
      %53 = vector.shape_cast %50 : vector<1x128xf32> to vector<1x1x1x1x128xf32>
      tpu.vector_store %arg4[%c0_28, %c0_29, %c0_30, %c0_31, %c0_32], %53 {strides = array<i32>} : memref<1x3x4x1x128xf32, #tpu.memory_space<vmem>>, vector<1x1x1x1x128xf32>,
      %c0_33 = arith.constant 0 : index
      %c1_34 = arith.constant 1 : index
      %c0_35 = arith.constant 0 : index
      %c0_36 = arith.constant 0 : index
      %c0_37 = arith.constant 0 : index
      %54 = vector.load %arg4[%c0_33, %c1_34, %c0_35, %c0_36, %c0_37] : memref<1x3x4x1x128xf32, #tpu.memory_space<vmem>>, vector<1x1x1x1x128xf32>
      %55 = vector.shape_cast %54 : vector<1x1x1x1x128xf32> to vector<1x128xf32>
      %cst_38 = arith.constant 1.000000e+00 : f32
      %cst_39 = arith.constant 0.000000e+00 : f32
      %56 = vector.broadcast %cst_38 : f32 to vector<32x128xf32>
      %57 = vector.broadcast %cst_39 : f32 to vector<32x128xf32>
      %58 = arith.select %43, %56, %57 : vector<32x128xi1>, vector<32x128xf32>
      %cst_40 = arith.constant dense<0.000000e+00> : vector<128xf32>
      %59 = vector.multi_reduction <add>, %58, %cst_40 [0] : vector<32x128xf32> to vector<128xf32>
      %60 = vector.shape_cast %59 : vector<128xf32> to vector<1x128xf32>
      %61 = arith.addf %55, %60 : vector<1x128xf32>
      %c0_41 = arith.constant 0 : index
      %c1_42 = arith.constant 1 : index
      %c0_43 = arith.constant 0 : index
      %c0_44 = arith.constant 0 : index
      %c0_45 = arith.constant 0 : index
      %62 = vector.load %arg4[%c0_41, %c1_42, %c0_43, %c0_44, %c0_45] : memref<1x3x4x1x128xf32, #tpu.memory_space<vmem>>, vector<1x1x1x1x128xf32>
      %63 = vector.shape_cast %62 : vector<1x1x1x1x128xf32> to vector<1x128xf32>
      %64 = vector.shape_cast %61 : vector<1x128xf32> to vector<1x1x1x1x128xf32>
      tpu.vector_store %arg4[%c0_41, %c1_42, %c0_43, %c0_44, %c0_45], %64 {strides = array<i32>} : memref<1x3x4x1x128xf32, #tpu.memory_space<vmem>>, vector<1x1x1x1x128xf32>,
      %c0_46 = arith.constant 0 : index
      %c2_47 = arith.constant 2 : index
      %c0_48 = arith.constant 0 : index
      %c0_49 = arith.constant 0 : index
      %c0_50 = arith.constant 0 : index
      %65 = vector.load %arg4[%c0_46, %c2_47, %c0_48, %c0_49, %c0_50] : memref<1x3x4x1x128xf32, #tpu.memory_space<vmem>>, vector<1x1x1x1x128xf32>
      %66 = vector.shape_cast %65 : vector<1x1x1x1x128xf32> to vector<1x128xf32>
      %cst_51 = arith.constant dense<0.000000e+00> : vector<128xf32>
      %67 = vector.multi_reduction <add>, %32, %cst_51 [0] : vector<32x128xf32> to vector<128xf32>
      %68 = vector.shape_cast %67 : vector<128xf32> to vector<1x128xf32>
      %69 = arith.addf %66, %68 : vector<1x128xf32>
      %c0_52 = arith.constant 0 : index
      %c2_53 = arith.constant 2 : index
      %c0_54 = arith.constant 0 : index
      %c0_55 = arith.constant 0 : index
      %c0_56 = arith.constant 0 : index
      %70 = vector.load %arg4[%c0_52, %c2_53, %c0_54, %c0_55, %c0_56] : memref<1x3x4x1x128xf32, #tpu.memory_space<vmem>>, vector<1x1x1x1x128xf32>
      %71 = vector.shape_cast %70 : vector<1x1x1x1x128xf32> to vector<1x128xf32>
      %72 = vector.shape_cast %69 : vector<1x128xf32> to vector<1x1x1x1x128xf32>
      tpu.vector_store %arg4[%c0_52, %c2_53, %c0_54, %c0_55, %c0_56], %72 {strides = array<i32>} : memref<1x3x4x1x128xf32, #tpu.memory_space<vmem>>, vector<1x1x1x1x128xf32>,
      %c1_i32 = arith.constant 1 : i32
      %73 = vector.broadcast %c1_i32 : i32 to vector<32x128xi32>
      %74 = arith.cmpi eq, %4, %73 : vector<32x128xi32>
      %c0_57 = arith.constant 0 : index
      %c0_58 = arith.constant 0 : index
      %c1_59 = arith.constant 1 : index
      %c0_60 = arith.constant 0 : index
      %c0_61 = arith.constant 0 : index
      %75 = vector.load %arg4[%c0_57, %c0_58, %c1_59, %c0_60, %c0_61] : memref<1x3x4x1x128xf32, #tpu.memory_space<vmem>>, vector<1x1x1x1x128xf32>
      %76 = vector.shape_cast %75 : vector<1x1x1x1x128xf32> to vector<1x128xf32>
      %cst_62 = arith.constant 0.000000e+00 : f32
      %77 = vector.broadcast %cst_62 : f32 to vector<32x128xf32>
      %78 = arith.select %74, %33, %77 : vector<32x128xi1>, vector<32x128xf32>
      %cst_63 = arith.constant dense<0.000000e+00> : vector<128xf32>
      %79 = vector.multi_reduction <add>, %78, %cst_63 [0] : vector<32x128xf32> to vector<128xf32>
      %80 = vector.shape_cast %79 : vector<128xf32> to vector<1x128xf32>
      %81 = arith.addf %76, %80 : vector<1x128xf32>
      %c0_64 = arith.constant 0 : index
      %c0_65 = arith.constant 0 : index
      %c1_66 = arith.constant 1 : index
      %c0_67 = arith.constant 0 : index
      %c0_68 = arith.constant 0 : index
      %82 = vector.load %arg4[%c0_64, %c0_65, %c1_66, %c0_67, %c0_68] : memref<1x3x4x1x128xf32, #tpu.memory_space<vmem>>, vector<1x1x1x1x128xf32>
      %83 = vector.shape_cast %82 : vector<1x1x1x1x128xf32> to vector<1x128xf32>
      %84 = vector.shape_cast %81 : vector<1x128xf32> to vector<1x1x1x1x128xf32>
      tpu.vector_store %arg4[%c0_64, %c0_65, %c1_66, %c0_67, %c0_68], %84 {strides = array<i32>} : memref<1x3x4x1x128xf32, #tpu.memory_space<vmem>>, vector<1x1x1x1x128xf32>,
      %c0_69 = arith.constant 0 : index
      %c1_70 = arith.constant 1 : index
      %c1_71 = arith.constant 1 : index
      %c0_72 = arith.constant 0 : index
      %c0_73 = arith.constant 0 : index
      %85 = vector.load %arg4[%c0_69, %c1_70, %c1_71, %c0_72, %c0_73] : memref<1x3x4x1x128xf32, #tpu.memory_space<vmem>>, vector<1x1x1x1x128xf32>
      %86 = vector.shape_cast %85 : vector<1x1x1x1x128xf32> to vector<1x128xf32>
      %cst_74 = arith.constant 1.000000e+00 : f32
      %cst_75 = arith.constant 0.000000e+00 : f32
      %87 = vector.broadcast %cst_74 : f32 to vector<32x128xf32>
      %88 = vector.broadcast %cst_75 : f32 to vector<32x128xf32>
      %89 = arith.select %74, %87, %88 : vector<32x128xi1>, vector<32x128xf32>
      %cst_76 = arith.constant dense<0.000000e+00> : vector<128xf32>
      %90 = vector.multi_reduction <add>, %89, %cst_76 [0] : vector<32x128xf32> to vector<128xf32>
      %91 = vector.shape_cast %90 : vector<128xf32> to vector<1x128xf32>
      %92 = arith.addf %86, %91 : vector<1x128xf32>
      %c0_77 = arith.constant 0 : index
      %c1_78 = arith.constant 1 : index
      %c1_79 = arith.constant 1 : index
      %c0_80 = arith.constant 0 : index
      %c0_81 = arith.constant 0 : index
      %93 = vector.load %arg4[%c0_77, %c1_78, %c1_79, %c0_80, %c0_81] : memref<1x3x4x1x128xf32, #tpu.memory_space<vmem>>, vector<1x1x1x1x128xf32>
      %94 = vector.shape_cast %93 : vector<1x1x1x1x128xf32> to vector<1x128xf32>
      %95 = vector.shape_cast %92 : vector<1x128xf32> to vector<1x1x1x1x128xf32>
      tpu.vector_store %arg4[%c0_77, %c1_78, %c1_79, %c0_80, %c0_81], %95 {strides = array<i32>} : memref<1x3x4x1x128xf32, #tpu.memory_space<vmem>>, vector<1x1x1x1x128xf32>,
      %c0_82 = arith.constant 0 : index
      %c2_83 = arith.constant 2 : index
      %c1_84 = arith.constant 1 : index
      %c0_85 = arith.constant 0 : index
      %c0_86 = arith.constant 0 : index
      %96 = vector.load %arg4[%c0_82, %c2_83, %c1_84, %c0_85, %c0_86] : memref<1x3x4x1x128xf32, #tpu.memory_space<vmem>>, vector<1x1x1x1x128xf32>
      %97 = vector.shape_cast %96 : vector<1x1x1x1x128xf32> to vector<1x128xf32>
      %cst_87 = arith.constant dense<0.000000e+00> : vector<128xf32>
      %98 = vector.multi_reduction <add>, %33, %cst_87 [0] : vector<32x128xf32> to vector<128xf32>
      %99 = vector.shape_cast %98 : vector<128xf32> to vector<1x128xf32>
      %100 = arith.addf %97, %99 : vector<1x128xf32>
      %c0_88 = arith.constant 0 : index
      %c2_89 = arith.constant 2 : index
      %c1_90 = arith.constant 1 : index
      %c0_91 = arith.constant 0 : index
      %c0_92 = arith.constant 0 : index
      %101 = vector.load %arg4[%c0_88, %c2_89, %c1_90, %c0_91, %c0_92] : memref<1x3x4x1x128xf32, #tpu.memory_space<vmem>>, vector<1x1x1x1x128xf32>
      %102 = vector.shape_cast %101 : vector<1x1x1x1x128xf32> to vector<1x128xf32>
      %103 = vector.shape_cast %100 : vector<1x128xf32> to vector<1x1x1x1x128xf32>
      tpu.vector_store %arg4[%c0_88, %c2_89, %c1_90, %c0_91, %c0_92], %103 {strides = array<i32>} : memref<1x3x4x1x128xf32, #tpu.memory_space<vmem>>, vector<1x1x1x1x128xf32>,
      %c2_i32 = arith.constant 2 : i32
      %104 = vector.broadcast %c2_i32 : i32 to vector<32x128xi32>
      %105 = arith.cmpi eq, %4, %104 : vector<32x128xi32>
      %c0_93 = arith.constant 0 : index
      %c0_94 = arith.constant 0 : index
      %c2_95 = arith.constant 2 : index
      %c0_96 = arith.constant 0 : index
      %c0_97 = arith.constant 0 : index
      %106 = vector.load %arg4[%c0_93, %c0_94, %c2_95, %c0_96, %c0_97] : memref<1x3x4x1x128xf32, #tpu.memory_space<vmem>>, vector<1x1x1x1x128xf32>
      %107 = vector.shape_cast %106 : vector<1x1x1x1x128xf32> to vector<1x128xf32>
      %cst_98 = arith.constant 0.000000e+00 : f32
      %108 = vector.broadcast %cst_98 : f32 to vector<32x128xf32>
      %109 = arith.select %105, %34, %108 : vector<32x128xi1>, vector<32x128xf32>
      %cst_99 = arith.constant dense<0.000000e+00> : vector<128xf32>
      %110 = vector.multi_reduction <add>, %109, %cst_99 [0] : vector<32x128xf32> to vector<128xf32>
      %111 = vector.shape_cast %110 : vector<128xf32> to vector<1x128xf32>
      %112 = arith.addf %107, %111 : vector<1x128xf32>
      %c0_100 = arith.constant 0 : index
      %c0_101 = arith.constant 0 : index
      %c2_102 = arith.constant 2 : index
      %c0_103 = arith.constant 0 : index
      %c0_104 = arith.constant 0 : index
      %113 = vector.load %arg4[%c0_100, %c0_101, %c2_102, %c0_103, %c0_104] : memref<1x3x4x1x128xf32, #tpu.memory_space<vmem>>, vector<1x1x1x1x128xf32>
      %114 = vector.shape_cast %113 : vector<1x1x1x1x128xf32> to vector<1x128xf32>
      %115 = vector.shape_cast %112 : vector<1x128xf32> to vector<1x1x1x1x128xf32>
      tpu.vector_store %arg4[%c0_100, %c0_101, %c2_102, %c0_103, %c0_104], %115 {strides = array<i32>} : memref<1x3x4x1x128xf32, #tpu.memory_space<vmem>>, vector<1x1x1x1x128xf32>,
      %c0_105 = arith.constant 0 : index
      %c1_106 = arith.constant 1 : index
      %c2_107 = arith.constant 2 : index
      %c0_108 = arith.constant 0 : index
      %c0_109 = arith.constant 0 : index
      %116 = vector.load %arg4[%c0_105, %c1_106, %c2_107, %c0_108, %c0_109] : memref<1x3x4x1x128xf32, #tpu.memory_space<vmem>>, vector<1x1x1x1x128xf32>
      %117 = vector.shape_cast %116 : vector<1x1x1x1x128xf32> to vector<1x128xf32>
      %cst_110 = arith.constant 1.000000e+00 : f32
      %cst_111 = arith.constant 0.000000e+00 : f32
      %118 = vector.broadcast %cst_110 : f32 to vector<32x128xf32>
      %119 = vector.broadcast %cst_111 : f32 to vector<32x128xf32>
      %120 = arith.select %105, %118, %119 : vector<32x128xi1>, vector<32x128xf32>
      %cst_112 = arith.constant dense<0.000000e+00> : vector<128xf32>
      %121 = vector.multi_reduction <add>, %120, %cst_112 [0] : vector<32x128xf32> to vector<128xf32>
      %122 = vector.shape_cast %121 : vector<128xf32> to vector<1x128xf32>
      %123 = arith.addf %117, %122 : vector<1x128xf32>
      %c0_113 = arith.constant 0 : index
      %c1_114 = arith.constant 1 : index
      %c2_115 = arith.constant 2 : index
      %c0_116 = arith.constant 0 : index
      %c0_117 = arith.constant 0 : index
      %124 = vector.load %arg4[%c0_113, %c1_114, %c2_115, %c0_116, %c0_117] : memref<1x3x4x1x128xf32, #tpu.memory_space<vmem>>, vector<1x1x1x1x128xf32>
      %125 = vector.shape_cast %124 : vector<1x1x1x1x128xf32> to vector<1x128xf32>
      %126 = vector.shape_cast %123 : vector<1x128xf32> to vector<1x1x1x1x128xf32>
      tpu.vector_store %arg4[%c0_113, %c1_114, %c2_115, %c0_116, %c0_117], %126 {strides = array<i32>} : memref<1x3x4x1x128xf32, #tpu.memory_space<vmem>>, vector<1x1x1x1x128xf32>,
      %c0_118 = arith.constant 0 : index
      %c2_119 = arith.constant 2 : index
      %c2_120 = arith.constant 2 : index
      %c0_121 = arith.constant 0 : index
      %c0_122 = arith.constant 0 : index
      %127 = vector.load %arg4[%c0_118, %c2_119, %c2_120, %c0_121, %c0_122] : memref<1x3x4x1x128xf32, #tpu.memory_space<vmem>>, vector<1x1x1x1x128xf32>
      %128 = vector.shape_cast %127 : vector<1x1x1x1x128xf32> to vector<1x128xf32>
      %cst_123 = arith.constant dense<0.000000e+00> : vector<128xf32>
      %129 = vector.multi_reduction <add>, %34, %cst_123 [0] : vector<32x128xf32> to vector<128xf32>
      %130 = vector.shape_cast %129 : vector<128xf32> to vector<1x128xf32>
      %131 = arith.addf %128, %130 : vector<1x128xf32>
      %c0_124 = arith.constant 0 : index
      %c2_125 = arith.constant 2 : index
      %c2_126 = arith.constant 2 : index
      %c0_127 = arith.constant 0 : index
      %c0_128 = arith.constant 0 : index
      %132 = vector.load %arg4[%c0_124, %c2_125, %c2_126, %c0_127, %c0_128] : memref<1x3x4x1x128xf32, #tpu.memory_space<vmem>>, vector<1x1x1x1x128xf32>
      %133 = vector.shape_cast %132 : vector<1x1x1x1x128xf32> to vector<1x128xf32>
      %134 = vector.shape_cast %131 : vector<1x128xf32> to vector<1x1x1x1x128xf32>
      tpu.vector_store %arg4[%c0_124, %c2_125, %c2_126, %c0_127, %c0_128], %134 {strides = array<i32>} : memref<1x3x4x1x128xf32, #tpu.memory_space<vmem>>, vector<1x1x1x1x128xf32>,
      %c3_i32 = arith.constant 3 : i32
      %135 = vector.broadcast %c3_i32 : i32 to vector<32x128xi32>
      %136 = arith.cmpi eq, %4, %135 : vector<32x128xi32>
      %c0_129 = arith.constant 0 : index
      %c0_130 = arith.constant 0 : index
      %c3_131 = arith.constant 3 : index
      %c0_132 = arith.constant 0 : index
      %c0_133 = arith.constant 0 : index
      %137 = vector.load %arg4[%c0_129, %c0_130, %c3_131, %c0_132, %c0_133] : memref<1x3x4x1x128xf32, #tpu.memory_space<vmem>>, vector<1x1x1x1x128xf32>
      %138 = vector.shape_cast %137 : vector<1x1x1x1x128xf32> to vector<1x128xf32>
      %cst_134 = arith.constant 0.000000e+00 : f32
      %139 = vector.broadcast %cst_134 : f32 to vector<32x128xf32>
      %140 = arith.select %136, %35, %139 : vector<32x128xi1>, vector<32x128xf32>
      %cst_135 = arith.constant dense<0.000000e+00> : vector<128xf32>
      %141 = vector.multi_reduction <add>, %140, %cst_135 [0] : vector<32x128xf32> to vector<128xf32>
      %142 = vector.shape_cast %141 : vector<128xf32> to vector<1x128xf32>
      %143 = arith.addf %138, %142 : vector<1x128xf32>
      %c0_136 = arith.constant 0 : index
      %c0_137 = arith.constant 0 : index
      %c3_138 = arith.constant 3 : index
      %c0_139 = arith.constant 0 : index
      %c0_140 = arith.constant 0 : index
      %144 = vector.load %arg4[%c0_136, %c0_137, %c3_138, %c0_139, %c0_140] : memref<1x3x4x1x128xf32, #tpu.memory_space<vmem>>, vector<1x1x1x1x128xf32>
      %145 = vector.shape_cast %144 : vector<1x1x1x1x128xf32> to vector<1x128xf32>
      %146 = vector.shape_cast %143 : vector<1x128xf32> to vector<1x1x1x1x128xf32>
      tpu.vector_store %arg4[%c0_136, %c0_137, %c3_138, %c0_139, %c0_140], %146 {strides = array<i32>} : memref<1x3x4x1x128xf32, #tpu.memory_space<vmem>>, vector<1x1x1x1x128xf32>,
      %c0_141 = arith.constant 0 : index
      %c1_142 = arith.constant 1 : index
      %c3_143 = arith.constant 3 : index
      %c0_144 = arith.constant 0 : index
      %c0_145 = arith.constant 0 : index
      %147 = vector.load %arg4[%c0_141, %c1_142, %c3_143, %c0_144, %c0_145] : memref<1x3x4x1x128xf32, #tpu.memory_space<vmem>>, vector<1x1x1x1x128xf32>
      %148 = vector.shape_cast %147 : vector<1x1x1x1x128xf32> to vector<1x128xf32>
      %cst_146 = arith.constant 1.000000e+00 : f32
      %cst_147 = arith.constant 0.000000e+00 : f32
      %149 = vector.broadcast %cst_146 : f32 to vector<32x128xf32>
      %150 = vector.broadcast %cst_147 : f32 to vector<32x128xf32>
      %151 = arith.select %136, %149, %150 : vector<32x128xi1>, vector<32x128xf32>
      %cst_148 = arith.constant dense<0.000000e+00> : vector<128xf32>
      %152 = vector.multi_reduction <add>, %151, %cst_148 [0] : vector<32x128xf32> to vector<128xf32>
      %153 = vector.shape_cast %152 : vector<128xf32> to vector<1x128xf32>
      %154 = arith.addf %148, %153 : vector<1x128xf32>
      %c0_149 = arith.constant 0 : index
      %c1_150 = arith.constant 1 : index
      %c3_151 = arith.constant 3 : index
      %c0_152 = arith.constant 0 : index
      %c0_153 = arith.constant 0 : index
      %155 = vector.load %arg4[%c0_149, %c1_150, %c3_151, %c0_152, %c0_153] : memref<1x3x4x1x128xf32, #tpu.memory_space<vmem>>, vector<1x1x1x1x128xf32>
      %156 = vector.shape_cast %155 : vector<1x1x1x1x128xf32> to vector<1x128xf32>
      %157 = vector.shape_cast %154 : vector<1x128xf32> to vector<1x1x1x1x128xf32>
      tpu.vector_store %arg4[%c0_149, %c1_150, %c3_151, %c0_152, %c0_153], %157 {strides = array<i32>} : memref<1x3x4x1x128xf32, #tpu.memory_space<vmem>>, vector<1x1x1x1x128xf32>,
      %c0_154 = arith.constant 0 : index
      %c2_155 = arith.constant 2 : index
      %c3_156 = arith.constant 3 : index
      %c0_157 = arith.constant 0 : index
      %c0_158 = arith.constant 0 : index
      %158 = vector.load %arg4[%c0_154, %c2_155, %c3_156, %c0_157, %c0_158] : memref<1x3x4x1x128xf32, #tpu.memory_space<vmem>>, vector<1x1x1x1x128xf32>
      %159 = vector.shape_cast %158 : vector<1x1x1x1x128xf32> to vector<1x128xf32>
      %cst_159 = arith.constant dense<0.000000e+00> : vector<128xf32>
      %160 = vector.multi_reduction <add>, %35, %cst_159 [0] : vector<32x128xf32> to vector<128xf32>
      %161 = vector.shape_cast %160 : vector<128xf32> to vector<1x128xf32>
      %162 = arith.addf %159, %161 : vector<1x128xf32>
      %c0_160 = arith.constant 0 : index
      %c2_161 = arith.constant 2 : index
      %c3_162 = arith.constant 3 : index
      %c0_163 = arith.constant 0 : index
      %c0_164 = arith.constant 0 : index
      %163 = vector.load %arg4[%c0_160, %c2_161, %c3_162, %c0_163, %c0_164] : memref<1x3x4x1x128xf32, #tpu.memory_space<vmem>>, vector<1x1x1x1x128xf32>
      %164 = vector.shape_cast %163 : vector<1x1x1x1x128xf32> to vector<1x128xf32>
      %165 = vector.shape_cast %162 : vector<1x128xf32> to vector<1x1x1x1x128xf32>
      tpu.vector_store %arg4[%c0_160, %c2_161, %c3_162, %c0_163, %c0_164], %165 {strides = array<i32>} : memref<1x3x4x1x128xf32, #tpu.memory_space<vmem>>, vector<1x1x1x1x128xf32>,
    } else {
    }
    %c0_i32_18 = arith.constant 0 : i32
    %39 = arith.cmpi eq, %arg1, %c0_i32_18 : i32
    %40 = arith.extui %39 : i1 to i32
    %c0_i32_19 = arith.constant 0 : i32
    %41 = arith.cmpi ne, %40, %c0_i32_19 : i32
    scf.if %41 {
      %42 = tpu.iota {dimensions = array<i32: 0>} : vector<32x128xi32>
      %43 = tpu.iota {dimensions = array<i32: 1>} : vector<32x128xi32>
      %c4096_i32 = arith.constant 4096 : i32
      %44 = arith.muli %arg1, %c4096_i32 : i32
      %c128_i32 = arith.constant 128 : i32
      %45 = vector.broadcast %c128_i32 : i32 to vector<32x128xi32>
      %46 = arith.muli %42, %45 : vector<32x128xi32>
      %47 = vector.broadcast %44 : i32 to vector<32x128xi32>
      %48 = arith.addi %47, %46 : vector<32x128xi32>
      %49 = arith.addi %48, %43 : vector<32x128xi32>
      %c256_i32 = arith.constant 256 : i32
      %50 = vector.broadcast %c256_i32 : i32 to vector<32x128xi32>
      %51 = arith.cmpi slt, %49, %50 : vector<32x128xi32>
      %c0_i32_20 = arith.constant 0 : i32
      %52 = vector.broadcast %c0_i32_20 : i32 to vector<32x128xi32>
      %53 = arith.cmpi eq, %4, %52 : vector<32x128xi32>
      %54 = arith.andi %53, %51 : vector<32x128xi1>
      %cst_21 = arith.constant 0.000000e+00 : f32
      %55 = vector.broadcast %cst_21 : f32 to vector<32x128xf32>
      %56 = arith.select %51, %32, %55 : vector<32x128xi1>, vector<32x128xf32>
      %c0_22 = arith.constant 0 : index
      %c0_23 = arith.constant 0 : index
      %c0_24 = arith.constant 0 : index
      %c0_25 = arith.constant 0 : index
      %c0_26 = arith.constant 0 : index
      %57 = vector.load %arg4[%c0_22, %c0_23, %c0_24, %c0_25, %c0_26] : memref<1x3x4x1x128xf32, #tpu.memory_space<vmem>>, vector<1x1x1x1x128xf32>
      %58 = vector.shape_cast %57 : vector<1x1x1x1x128xf32> to vector<1x128xf32>
      %cst_27 = arith.constant 0.000000e+00 : f32
      %59 = vector.broadcast %cst_27 : f32 to vector<32x128xf32>
      %60 = arith.select %54, %56, %59 : vector<32x128xi1>, vector<32x128xf32>
      %cst_28 = arith.constant dense<0.000000e+00> : vector<128xf32>
      %61 = vector.multi_reduction <add>, %60, %cst_28 [0] : vector<32x128xf32> to vector<128xf32>
      %62 = vector.shape_cast %61 : vector<128xf32> to vector<1x128xf32>
      %63 = arith.addf %58, %62 : vector<1x128xf32>
      %c0_29 = arith.constant 0 : index
      %c0_30 = arith.constant 0 : index
      %c0_31 = arith.constant 0 : index
      %c0_32 = arith.constant 0 : index
      %c0_33 = arith.constant 0 : index
      %64 = vector.load %arg4[%c0_29, %c0_30, %c0_31, %c0_32, %c0_33] : memref<1x3x4x1x128xf32, #tpu.memory_space<vmem>>, vector<1x1x1x1x128xf32>
      %65 = vector.shape_cast %64 : vector<1x1x1x1x128xf32> to vector<1x128xf32>
      %66 = vector.shape_cast %63 : vector<1x128xf32> to vector<1x1x1x1x128xf32>
      tpu.vector_store %arg4[%c0_29, %c0_30, %c0_31, %c0_32, %c0_33], %66 {strides = array<i32>} : memref<1x3x4x1x128xf32, #tpu.memory_space<vmem>>, vector<1x1x1x1x128xf32>,
      %c0_34 = arith.constant 0 : index
      %c1_35 = arith.constant 1 : index
      %c0_36 = arith.constant 0 : index
      %c0_37 = arith.constant 0 : index
      %c0_38 = arith.constant 0 : index
      %67 = vector.load %arg4[%c0_34, %c1_35, %c0_36, %c0_37, %c0_38] : memref<1x3x4x1x128xf32, #tpu.memory_space<vmem>>, vector<1x1x1x1x128xf32>
      %68 = vector.shape_cast %67 : vector<1x1x1x1x128xf32> to vector<1x128xf32>
      %cst_39 = arith.constant 1.000000e+00 : f32
      %cst_40 = arith.constant 0.000000e+00 : f32
      %69 = vector.broadcast %cst_39 : f32 to vector<32x128xf32>
      %70 = vector.broadcast %cst_40 : f32 to vector<32x128xf32>
      %71 = arith.select %54, %69, %70 : vector<32x128xi1>, vector<32x128xf32>
      %cst_41 = arith.constant dense<0.000000e+00> : vector<128xf32>
      %72 = vector.multi_reduction <add>, %71, %cst_41 [0] : vector<32x128xf32> to vector<128xf32>
      %73 = vector.shape_cast %72 : vector<128xf32> to vector<1x128xf32>
      %74 = arith.addf %68, %73 : vector<1x128xf32>
      %c0_42 = arith.constant 0 : index
      %c1_43 = arith.constant 1 : index
      %c0_44 = arith.constant 0 : index
      %c0_45 = arith.constant 0 : index
      %c0_46 = arith.constant 0 : index
      %75 = vector.load %arg4[%c0_42, %c1_43, %c0_44, %c0_45, %c0_46] : memref<1x3x4x1x128xf32, #tpu.memory_space<vmem>>, vector<1x1x1x1x128xf32>
      %76 = vector.shape_cast %75 : vector<1x1x1x1x128xf32> to vector<1x128xf32>
      %77 = vector.shape_cast %74 : vector<1x128xf32> to vector<1x1x1x1x128xf32>
      tpu.vector_store %arg4[%c0_42, %c1_43, %c0_44, %c0_45, %c0_46], %77 {strides = array<i32>} : memref<1x3x4x1x128xf32, #tpu.memory_space<vmem>>, vector<1x1x1x1x128xf32>,
      %c0_47 = arith.constant 0 : index
      %c2_48 = arith.constant 2 : index
      %c0_49 = arith.constant 0 : index
      %c0_50 = arith.constant 0 : index
      %c0_51 = arith.constant 0 : index
      %78 = vector.load %arg4[%c0_47, %c2_48, %c0_49, %c0_50, %c0_51] : memref<1x3x4x1x128xf32, #tpu.memory_space<vmem>>, vector<1x1x1x1x128xf32>
      %79 = vector.shape_cast %78 : vector<1x1x1x1x128xf32> to vector<1x128xf32>
      %cst_52 = arith.constant dense<0.000000e+00> : vector<128xf32>
      %80 = vector.multi_reduction <add>, %56, %cst_52 [0] : vector<32x128xf32> to vector<128xf32>
      %81 = vector.shape_cast %80 : vector<128xf32> to vector<1x128xf32>
      %82 = arith.addf %79, %81 : vector<1x128xf32>
      %c0_53 = arith.constant 0 : index
      %c2_54 = arith.constant 2 : index
      %c0_55 = arith.constant 0 : index
      %c0_56 = arith.constant 0 : index
      %c0_57 = arith.constant 0 : index
      %83 = vector.load %arg4[%c0_53, %c2_54, %c0_55, %c0_56, %c0_57] : memref<1x3x4x1x128xf32, #tpu.memory_space<vmem>>, vector<1x1x1x1x128xf32>
      %84 = vector.shape_cast %83 : vector<1x1x1x1x128xf32> to vector<1x128xf32>
      %85 = vector.shape_cast %82 : vector<1x128xf32> to vector<1x1x1x1x128xf32>
      tpu.vector_store %arg4[%c0_53, %c2_54, %c0_55, %c0_56, %c0_57], %85 {strides = array<i32>} : memref<1x3x4x1x128xf32, #tpu.memory_space<vmem>>, vector<1x1x1x1x128xf32>,
      %c1_i32 = arith.constant 1 : i32
      %86 = vector.broadcast %c1_i32 : i32 to vector<32x128xi32>
      %87 = arith.cmpi eq, %4, %86 : vector<32x128xi32>
      %88 = arith.andi %87, %51 : vector<32x128xi1>
      %cst_58 = arith.constant 0.000000e+00 : f32
      %89 = vector.broadcast %cst_58 : f32 to vector<32x128xf32>
      %90 = arith.select %51, %33, %89 : vector<32x128xi1>, vector<32x128xf32>
      %c0_59 = arith.constant 0 : index
      %c0_60 = arith.constant 0 : index
      %c1_61 = arith.constant 1 : index
      %c0_62 = arith.constant 0 : index
      %c0_63 = arith.constant 0 : index
      %91 = vector.load %arg4[%c0_59, %c0_60, %c1_61, %c0_62, %c0_63] : memref<1x3x4x1x128xf32, #tpu.memory_space<vmem>>, vector<1x1x1x1x128xf32>
      %92 = vector.shape_cast %91 : vector<1x1x1x1x128xf32> to vector<1x128xf32>
      %cst_64 = arith.constant 0.000000e+00 : f32
      %93 = vector.broadcast %cst_64 : f32 to vector<32x128xf32>
      %94 = arith.select %88, %90, %93 : vector<32x128xi1>, vector<32x128xf32>
      %cst_65 = arith.constant dense<0.000000e+00> : vector<128xf32>
      %95 = vector.multi_reduction <add>, %94, %cst_65 [0] : vector<32x128xf32> to vector<128xf32>
      %96 = vector.shape_cast %95 : vector<128xf32> to vector<1x128xf32>
      %97 = arith.addf %92, %96 : vector<1x128xf32>
      %c0_66 = arith.constant 0 : index
      %c0_67 = arith.constant 0 : index
      %c1_68 = arith.constant 1 : index
      %c0_69 = arith.constant 0 : index
      %c0_70 = arith.constant 0 : index
      %98 = vector.load %arg4[%c0_66, %c0_67, %c1_68, %c0_69, %c0_70] : memref<1x3x4x1x128xf32, #tpu.memory_space<vmem>>, vector<1x1x1x1x128xf32>
      %99 = vector.shape_cast %98 : vector<1x1x1x1x128xf32> to vector<1x128xf32>
      %100 = vector.shape_cast %97 : vector<1x128xf32> to vector<1x1x1x1x128xf32>
      tpu.vector_store %arg4[%c0_66, %c0_67, %c1_68, %c0_69, %c0_70], %100 {strides = array<i32>} : memref<1x3x4x1x128xf32, #tpu.memory_space<vmem>>, vector<1x1x1x1x128xf32>,
      %c0_71 = arith.constant 0 : index
      %c1_72 = arith.constant 1 : index
      %c1_73 = arith.constant 1 : index
      %c0_74 = arith.constant 0 : index
      %c0_75 = arith.constant 0 : index
      %101 = vector.load %arg4[%c0_71, %c1_72, %c1_73, %c0_74, %c0_75] : memref<1x3x4x1x128xf32, #tpu.memory_space<vmem>>, vector<1x1x1x1x128xf32>
      %102 = vector.shape_cast %101 : vector<1x1x1x1x128xf32> to vector<1x128xf32>
      %cst_76 = arith.constant 1.000000e+00 : f32
      %cst_77 = arith.constant 0.000000e+00 : f32
      %103 = vector.broadcast %cst_76 : f32 to vector<32x128xf32>
      %104 = vector.broadcast %cst_77 : f32 to vector<32x128xf32>
      %105 = arith.select %88, %103, %104 : vector<32x128xi1>, vector<32x128xf32>
      %cst_78 = arith.constant dense<0.000000e+00> : vector<128xf32>
      %106 = vector.multi_reduction <add>, %105, %cst_78 [0] : vector<32x128xf32> to vector<128xf32>
      %107 = vector.shape_cast %106 : vector<128xf32> to vector<1x128xf32>
      %108 = arith.addf %102, %107 : vector<1x128xf32>
      %c0_79 = arith.constant 0 : index
      %c1_80 = arith.constant 1 : index
      %c1_81 = arith.constant 1 : index
      %c0_82 = arith.constant 0 : index
      %c0_83 = arith.constant 0 : index
      %109 = vector.load %arg4[%c0_79, %c1_80, %c1_81, %c0_82, %c0_83] : memref<1x3x4x1x128xf32, #tpu.memory_space<vmem>>, vector<1x1x1x1x128xf32>
      %110 = vector.shape_cast %109 : vector<1x1x1x1x128xf32> to vector<1x128xf32>
      %111 = vector.shape_cast %108 : vector<1x128xf32> to vector<1x1x1x1x128xf32>
      tpu.vector_store %arg4[%c0_79, %c1_80, %c1_81, %c0_82, %c0_83], %111 {strides = array<i32>} : memref<1x3x4x1x128xf32, #tpu.memory_space<vmem>>, vector<1x1x1x1x128xf32>,
      %c0_84 = arith.constant 0 : index
      %c2_85 = arith.constant 2 : index
      %c1_86 = arith.constant 1 : index
      %c0_87 = arith.constant 0 : index
      %c0_88 = arith.constant 0 : index
      %112 = vector.load %arg4[%c0_84, %c2_85, %c1_86, %c0_87, %c0_88] : memref<1x3x4x1x128xf32, #tpu.memory_space<vmem>>, vector<1x1x1x1x128xf32>
      %113 = vector.shape_cast %112 : vector<1x1x1x1x128xf32> to vector<1x128xf32>
      %cst_89 = arith.constant dense<0.000000e+00> : vector<128xf32>
      %114 = vector.multi_reduction <add>, %90, %cst_89 [0] : vector<32x128xf32> to vector<128xf32>
      %115 = vector.shape_cast %114 : vector<128xf32> to vector<1x128xf32>
      %116 = arith.addf %113, %115 : vector<1x128xf32>
      %c0_90 = arith.constant 0 : index
      %c2_91 = arith.constant 2 : index
      %c1_92 = arith.constant 1 : index
      %c0_93 = arith.constant 0 : index
      %c0_94 = arith.constant 0 : index
      %117 = vector.load %arg4[%c0_90, %c2_91, %c1_92, %c0_93, %c0_94] : memref<1x3x4x1x128xf32, #tpu.memory_space<vmem>>, vector<1x1x1x1x128xf32>
      %118 = vector.shape_cast %117 : vector<1x1x1x1x128xf32> to vector<1x128xf32>
      %119 = vector.shape_cast %116 : vector<1x128xf32> to vector<1x1x1x1x128xf32>
      tpu.vector_store %arg4[%c0_90, %c2_91, %c1_92, %c0_93, %c0_94], %119 {strides = array<i32>} : memref<1x3x4x1x128xf32, #tpu.memory_space<vmem>>, vector<1x1x1x1x128xf32>,
      %c2_i32 = arith.constant 2 : i32
      %120 = vector.broadcast %c2_i32 : i32 to vector<32x128xi32>
      %121 = arith.cmpi eq, %4, %120 : vector<32x128xi32>
      %122 = arith.andi %121, %51 : vector<32x128xi1>
      %cst_95 = arith.constant 0.000000e+00 : f32
      %123 = vector.broadcast %cst_95 : f32 to vector<32x128xf32>
      %124 = arith.select %51, %34, %123 : vector<32x128xi1>, vector<32x128xf32>
      %c0_96 = arith.constant 0 : index
      %c0_97 = arith.constant 0 : index
      %c2_98 = arith.constant 2 : index
      %c0_99 = arith.constant 0 : index
      %c0_100 = arith.constant 0 : index
      %125 = vector.load %arg4[%c0_96, %c0_97, %c2_98, %c0_99, %c0_100] : memref<1x3x4x1x128xf32, #tpu.memory_space<vmem>>, vector<1x1x1x1x128xf32>
      %126 = vector.shape_cast %125 : vector<1x1x1x1x128xf32> to vector<1x128xf32>
      %cst_101 = arith.constant 0.000000e+00 : f32
      %127 = vector.broadcast %cst_101 : f32 to vector<32x128xf32>
      %128 = arith.select %122, %124, %127 : vector<32x128xi1>, vector<32x128xf32>
      %cst_102 = arith.constant dense<0.000000e+00> : vector<128xf32>
      %129 = vector.multi_reduction <add>, %128, %cst_102 [0] : vector<32x128xf32> to vector<128xf32>
      %130 = vector.shape_cast %129 : vector<128xf32> to vector<1x128xf32>
      %131 = arith.addf %126, %130 : vector<1x128xf32>
      %c0_103 = arith.constant 0 : index
      %c0_104 = arith.constant 0 : index
      %c2_105 = arith.constant 2 : index
      %c0_106 = arith.constant 0 : index
      %c0_107 = arith.constant 0 : index
      %132 = vector.load %arg4[%c0_103, %c0_104, %c2_105, %c0_106, %c0_107] : memref<1x3x4x1x128xf32, #tpu.memory_space<vmem>>, vector<1x1x1x1x128xf32>
      %133 = vector.shape_cast %132 : vector<1x1x1x1x128xf32> to vector<1x128xf32>
      %134 = vector.shape_cast %131 : vector<1x128xf32> to vector<1x1x1x1x128xf32>
      tpu.vector_store %arg4[%c0_103, %c0_104, %c2_105, %c0_106, %c0_107], %134 {strides = array<i32>} : memref<1x3x4x1x128xf32, #tpu.memory_space<vmem>>, vector<1x1x1x1x128xf32>,
      %c0_108 = arith.constant 0 : index
      %c1_109 = arith.constant 1 : index
      %c2_110 = arith.constant 2 : index
      %c0_111 = arith.constant 0 : index
      %c0_112 = arith.constant 0 : index
      %135 = vector.load %arg4[%c0_108, %c1_109, %c2_110, %c0_111, %c0_112] : memref<1x3x4x1x128xf32, #tpu.memory_space<vmem>>, vector<1x1x1x1x128xf32>
      %136 = vector.shape_cast %135 : vector<1x1x1x1x128xf32> to vector<1x128xf32>
      %cst_113 = arith.constant 1.000000e+00 : f32
      %cst_114 = arith.constant 0.000000e+00 : f32
      %137 = vector.broadcast %cst_113 : f32 to vector<32x128xf32>
      %138 = vector.broadcast %cst_114 : f32 to vector<32x128xf32>
      %139 = arith.select %122, %137, %138 : vector<32x128xi1>, vector<32x128xf32>
      %cst_115 = arith.constant dense<0.000000e+00> : vector<128xf32>
      %140 = vector.multi_reduction <add>, %139, %cst_115 [0] : vector<32x128xf32> to vector<128xf32>
      %141 = vector.shape_cast %140 : vector<128xf32> to vector<1x128xf32>
      %142 = arith.addf %136, %141 : vector<1x128xf32>
      %c0_116 = arith.constant 0 : index
      %c1_117 = arith.constant 1 : index
      %c2_118 = arith.constant 2 : index
      %c0_119 = arith.constant 0 : index
      %c0_120 = arith.constant 0 : index
      %143 = vector.load %arg4[%c0_116, %c1_117, %c2_118, %c0_119, %c0_120] : memref<1x3x4x1x128xf32, #tpu.memory_space<vmem>>, vector<1x1x1x1x128xf32>
      %144 = vector.shape_cast %143 : vector<1x1x1x1x128xf32> to vector<1x128xf32>
      %145 = vector.shape_cast %142 : vector<1x128xf32> to vector<1x1x1x1x128xf32>
      tpu.vector_store %arg4[%c0_116, %c1_117, %c2_118, %c0_119, %c0_120], %145 {strides = array<i32>} : memref<1x3x4x1x128xf32, #tpu.memory_space<vmem>>, vector<1x1x1x1x128xf32>,
      %c0_121 = arith.constant 0 : index
      %c2_122 = arith.constant 2 : index
      %c2_123 = arith.constant 2 : index
      %c0_124 = arith.constant 0 : index
      %c0_125 = arith.constant 0 : index
      %146 = vector.load %arg4[%c0_121, %c2_122, %c2_123, %c0_124, %c0_125] : memref<1x3x4x1x128xf32, #tpu.memory_space<vmem>>, vector<1x1x1x1x128xf32>
      %147 = vector.shape_cast %146 : vector<1x1x1x1x128xf32> to vector<1x128xf32>
      %cst_126 = arith.constant dense<0.000000e+00> : vector<128xf32>
      %148 = vector.multi_reduction <add>, %124, %cst_126 [0] : vector<32x128xf32> to vector<128xf32>
      %149 = vector.shape_cast %148 : vector<128xf32> to vector<1x128xf32>
      %150 = arith.addf %147, %149 : vector<1x128xf32>
      %c0_127 = arith.constant 0 : index
      %c2_128 = arith.constant 2 : index
      %c2_129 = arith.constant 2 : index
      %c0_130 = arith.constant 0 : index
      %c0_131 = arith.constant 0 : index
      %151 = vector.load %arg4[%c0_127, %c2_128, %c2_129, %c0_130, %c0_131] : memref<1x3x4x1x128xf32, #tpu.memory_space<vmem>>, vector<1x1x1x1x128xf32>
      %152 = vector.shape_cast %151 : vector<1x1x1x1x128xf32> to vector<1x128xf32>
      %153 = vector.shape_cast %150 : vector<1x128xf32> to vector<1x1x1x1x128xf32>
      tpu.vector_store %arg4[%c0_127, %c2_128, %c2_129, %c0_130, %c0_131], %153 {strides = array<i32>} : memref<1x3x4x1x128xf32, #tpu.memory_space<vmem>>, vector<1x1x1x1x128xf32>,
      %c3_i32 = arith.constant 3 : i32
      %154 = vector.broadcast %c3_i32 : i32 to vector<32x128xi32>
      %155 = arith.cmpi eq, %4, %154 : vector<32x128xi32>
      %156 = arith.andi %155, %51 : vector<32x128xi1>
      %cst_132 = arith.constant 0.000000e+00 : f32
      %157 = vector.broadcast %cst_132 : f32 to vector<32x128xf32>
      %158 = arith.select %51, %35, %157 : vector<32x128xi1>, vector<32x128xf32>
      %c0_133 = arith.constant 0 : index
      %c0_134 = arith.constant 0 : index
      %c3_135 = arith.constant 3 : index
      %c0_136 = arith.constant 0 : index
      %c0_137 = arith.constant 0 : index
      %159 = vector.load %arg4[%c0_133, %c0_134, %c3_135, %c0_136, %c0_137] : memref<1x3x4x1x128xf32, #tpu.memory_space<vmem>>, vector<1x1x1x1x128xf32>
      %160 = vector.shape_cast %159 : vector<1x1x1x1x128xf32> to vector<1x128xf32>
      %cst_138 = arith.constant 0.000000e+00 : f32
      %161 = vector.broadcast %cst_138 : f32 to vector<32x128xf32>
      %162 = arith.select %156, %158, %161 : vector<32x128xi1>, vector<32x128xf32>
      %cst_139 = arith.constant dense<0.000000e+00> : vector<128xf32>
      %163 = vector.multi_reduction <add>, %162, %cst_139 [0] : vector<32x128xf32> to vector<128xf32>
      %164 = vector.shape_cast %163 : vector<128xf32> to vector<1x128xf32>
      %165 = arith.addf %160, %164 : vector<1x128xf32>
      %c0_140 = arith.constant 0 : index
      %c0_141 = arith.constant 0 : index
      %c3_142 = arith.constant 3 : index
      %c0_143 = arith.constant 0 : index
      %c0_144 = arith.constant 0 : index
      %166 = vector.load %arg4[%c0_140, %c0_141, %c3_142, %c0_143, %c0_144] : memref<1x3x4x1x128xf32, #tpu.memory_space<vmem>>, vector<1x1x1x1x128xf32>
      %167 = vector.shape_cast %166 : vector<1x1x1x1x128xf32> to vector<1x128xf32>
      %168 = vector.shape_cast %165 : vector<1x128xf32> to vector<1x1x1x1x128xf32>
      tpu.vector_store %arg4[%c0_140, %c0_141, %c3_142, %c0_143, %c0_144], %168 {strides = array<i32>} : memref<1x3x4x1x128xf32, #tpu.memory_space<vmem>>, vector<1x1x1x1x128xf32>,
      %c0_145 = arith.constant 0 : index
      %c1_146 = arith.constant 1 : index
      %c3_147 = arith.constant 3 : index
      %c0_148 = arith.constant 0 : index
      %c0_149 = arith.constant 0 : index
      %169 = vector.load %arg4[%c0_145, %c1_146, %c3_147, %c0_148, %c0_149] : memref<1x3x4x1x128xf32, #tpu.memory_space<vmem>>, vector<1x1x1x1x128xf32>
      %170 = vector.shape_cast %169 : vector<1x1x1x1x128xf32> to vector<1x128xf32>
      %cst_150 = arith.constant 1.000000e+00 : f32
      %cst_151 = arith.constant 0.000000e+00 : f32
      %171 = vector.broadcast %cst_150 : f32 to vector<32x128xf32>
      %172 = vector.broadcast %cst_151 : f32 to vector<32x128xf32>
      %173 = arith.select %156, %171, %172 : vector<32x128xi1>, vector<32x128xf32>
      %cst_152 = arith.constant dense<0.000000e+00> : vector<128xf32>
      %174 = vector.multi_reduction <add>, %173, %cst_152 [0] : vector<32x128xf32> to vector<128xf32>
      %175 = vector.shape_cast %174 : vector<128xf32> to vector<1x128xf32>
      %176 = arith.addf %170, %175 : vector<1x128xf32>
      %c0_153 = arith.constant 0 : index
      %c1_154 = arith.constant 1 : index
      %c3_155 = arith.constant 3 : index
      %c0_156 = arith.constant 0 : index
      %c0_157 = arith.constant 0 : index
      %177 = vector.load %arg4[%c0_153, %c1_154, %c3_155, %c0_156, %c0_157] : memref<1x3x4x1x128xf32, #tpu.memory_space<vmem>>, vector<1x1x1x1x128xf32>
      %178 = vector.shape_cast %177 : vector<1x1x1x1x128xf32> to vector<1x128xf32>
      %179 = vector.shape_cast %176 : vector<1x128xf32> to vector<1x1x1x1x128xf32>
      tpu.vector_store %arg4[%c0_153, %c1_154, %c3_155, %c0_156, %c0_157], %179 {strides = array<i32>} : memref<1x3x4x1x128xf32, #tpu.memory_space<vmem>>, vector<1x1x1x1x128xf32>,
      %c0_158 = arith.constant 0 : index
      %c2_159 = arith.constant 2 : index
      %c3_160 = arith.constant 3 : index
      %c0_161 = arith.constant 0 : index
      %c0_162 = arith.constant 0 : index
      %180 = vector.load %arg4[%c0_158, %c2_159, %c3_160, %c0_161, %c0_162] : memref<1x3x4x1x128xf32, #tpu.memory_space<vmem>>, vector<1x1x1x1x128xf32>
      %181 = vector.shape_cast %180 : vector<1x1x1x1x128xf32> to vector<1x128xf32>
      %cst_163 = arith.constant dense<0.000000e+00> : vector<128xf32>
      %182 = vector.multi_reduction <add>, %158, %cst_163 [0] : vector<32x128xf32> to vector<128xf32>
      %183 = vector.shape_cast %182 : vector<128xf32> to vector<1x128xf32>
      %184 = arith.addf %181, %183 : vector<1x128xf32>
      %c0_164 = arith.constant 0 : index
      %c2_165 = arith.constant 2 : index
      %c3_166 = arith.constant 3 : index
      %c0_167 = arith.constant 0 : index
      %c0_168 = arith.constant 0 : index
      %185 = vector.load %arg4[%c0_164, %c2_165, %c3_166, %c0_167, %c0_168] : memref<1x3x4x1x128xf32, #tpu.memory_space<vmem>>, vector<1x1x1x1x128xf32>
      %186 = vector.shape_cast %185 : vector<1x1x1x1x128xf32> to vector<1x128xf32>
      %187 = vector.shape_cast %184 : vector<1x128xf32> to vector<1x1x1x1x128xf32>
      tpu.vector_store %arg4[%c0_164, %c2_165, %c3_166, %c0_167, %c0_168], %187 {strides = array<i32>} : memref<1x3x4x1x128xf32, #tpu.memory_space<vmem>>, vector<1x1x1x1x128xf32>,
    } else {
    }
    return
  }
  func.func @transform_0(%arg0: i32, %arg1: i32) -> (i32, i32, i32, i32) {
    %c0_i32 = arith.constant 0 : i32
    %c0_i32_0 = arith.constant 0 : i32
    %c0_i32_1 = arith.constant 0 : i32
    return %arg0, %c0_i32, %arg1, %c0_i32_0 : i32, i32, i32, i32
  }
  func.func @transform_1(%arg0: i32, %arg1: i32) -> (i32, i32, i32) {
    %c0_i32 = arith.constant 0 : i32
    %c0_i32_0 = arith.constant 0 : i32
    return %arg0, %arg1, %c0_i32 : i32, i32, i32
  }
  func.func @transform_2(%arg0: i32, %arg1: i32) -> (i32, i32, i32, i32, i32) {
    %c0_i32 = arith.constant 0 : i32
    %c0_i32_0 = arith.constant 0 : i32
    %c0_i32_1 = arith.constant 0 : i32
    %c0_i32_2 = arith.constant 0 : i32
    %c0_i32_3 = arith.constant 0 : i32
    return %arg0, %c0_i32, %c0_i32_0, %c0_i32_1, %c0_i32_2 : i32, i32, i32, i32, i32
  }
}

</mosaic_0001>

<llo_original>
// kernel: tpu_custom_call.1
$region0: #{tpu_custom_call.1}
  #allocation0 [shape = 'u32[]', space=smem, size = 0x4, offset = 0x4, fixed_abs, tag = 'smem constant byte address 0x4 - core index']
  #allocation1 [shape = 'u32[72,128]{1,0:T(1,128)}', space=vmem, size = 0x9000, scoped, tag = 'internal scratch']
  #allocation8 [shape = 's32[]', space=sflag, size = 0x4, offset = 0, fixed_abs, tag = 'sflag constant byte address 0x0 - dummy sync flag']
  %s0 = inlined_call_operand.hbm [shape: f32[2,4,2,128], index: 0, kind: input, shape index: {}]
  %s1 = inlined_call_operand.hbm [shape: s32[2,2,128], index: 1, kind: input, shape index: {}]
  %s2 = inlined_call_operand.hbm [shape: f32[2,3,4,1,128], index: 2, kind: output, shape index: {}]
  %s3 = sld [smem:[#allocation0]]
  $region61: #{tpu_custom_call.1} parent=0
    _
  %s5 = ssub.s32 1, %s3
  %s6 = scalar_select 0, %s5, %s3
  $region1: #{tpu_custom_call.1} parent=0
    #allocation2 [shape = 'u8[131072]{0}', space=vmem, size = 0x20000, scoped, tag = 'input window, operand 0']
    #allocation3 [shape = 's32[2]{0}', space=sflag, size = 0x8, scoped, tag = 'scoped memory for tpu_custom_call.1']
    #allocation4 [shape = 's32[2]{0}', space=sflag, size = 0x8, scoped, tag = 'scoped memory for tpu_custom_call.1']
    #allocation5 [shape = 'u8[32768]{0}', space=vmem, size = 0x8000, scoped, tag = 'input window, operand 1']
    #allocation6 [shape = 's32[2]{0}', space=sflag, size = 0x8, scoped, tag = 'scoped memory for tpu_custom_call.1']
    #allocation7 [shape = 'u8[12288]{0}', space=vmem, size = 0x3000, scoped, tag = 'output window, operand 0']
    %7 = vsyncpa [#allocation3], 0
    %s8 = scalar_lea.sflag [#allocation3], 1
    %9 = vsyncpa %s8, 0
    %10 = vsyncpa [#allocation6], 0
    %s11 = scalar_lea.sflag [#allocation6], 1
    %12 = vsyncpa %s11, 0
    %13 = vsyncpa [#allocation4], 0
    %s14 = scalar_lea.sflag [#allocation4], 1
    %15 = vsyncpa %s14, 0
    loop: start=0, step=1, limit=4
    $region2: #{tpu_custom_call.1} parent=1 // loop_pre_header
      _
    $region3: #{tpu_custom_call.1} parent=1 // loop_header
      %s17 = sphi 0, %s21
      %p18 = scmp.ge.s32.totalorder %s17, 4
      %s24 = sphi 0, %s36
      %s25 = sphi 0, %s32
      %s26 = sphi 0, %s24
      %s27 = sphi 0, %s25
      %s28 = sphi 0, %s26
      %s29 = sphi 0, %s27
      %s41 = sphi 0, %s43
      %s44 = sphi 0, %s41
      %s45 = sphi 0, %s44
      %s61 = sphi 0, %s45
      %s69 = sphi 0, %s71
      %s72 = sphi 0, %s69
      %s73 = sphi 0, %s72
      %s89 = sphi 0, %s73
      %s95 = sphi 0, %s97
      %s98 = sphi 0, %s95
      %s99 = sphi 0, %s98
      %s115 = sphi 0, %s99
    $region4: #{tpu_custom_call.1} parent=1 // loop_header_branch
      %20 = sbr.rel (%p18) target = $region8
    $region5: #{tpu_custom_call.1} parent=1 // loop_body
      %s22 = ssub.s32 %s17, 1
      %s23 = ssub.s32 %s17, 2
      %s30 = sadd.s32 1, %s25
      %p31 = scmp.ge.s32.totalorder %s30, 1
      %s32 = scalar_select %p31, 0, %s30
      %s33 = sadd.s32 1, %s24
      %s34 = scalar_select %p31, %s33, %s24
      %p35 = scmp.ge.s32.totalorder %s34, 2
      %s36 = scalar_select %p35, 0, %s34
      %s37 = ssub.s32 %s24, %s36
      %s38 = ssub.s32 %s25, %s32
      %s39 = sor.u32 %s37, %s38
      %p40 = scmp.eq.s32.totalorder %s39, 0
      %s42 = sadd.s32 %s41, 1
      %s43 = scalar_select %p40, %s41, %s42
      %p46 = pneg %p40
      %p47 = scmp.eq.s32.totalorder %s17, 1
      %p48 = por %p46, %p47
      %p49 = scmp.ne.s32.totalorder %s41, %s44
      %p50 = scmp.eq.s32.totalorder %s17, 0
      %p51 = por %p49, %p50
      %p52 = scmp.ne.s32.totalorder %s41, %s44
      %p53 = scmp.eq.s32.totalorder %s22, 1
      %p54 = por %p52, %p53
      %p55 = scmp.ne.s32.totalorder %s44, %s45
      %p56 = scmp.eq.s32.totalorder %s22, 0
      %p57 = por %p55, %p56
      %p58 = scmp.ne.s32.totalorder %s44, %s45
      %p59 = scmp.eq.s32.totalorder %s23, 1
      %p60 = por %p58, %p59
      %p62 = scmp.ne.s32.totalorder %s45, %s61
      %p63 = scmp.eq.s32.totalorder %s23, 0
      %p64 = por %p62, %p63
      %s65 = ssub.s32 %s24, %s36
      %s66 = ssub.s32 %s25, %s32
      %s67 = sor.u32 %s65, %s66
      %p68 = scmp.eq.s32.totalorder %s67, 0
      %s70 = sadd.s32 %s69, 1
      %s71 = scalar_select %p68, %s69, %s70
      %p74 = pneg %p68
      %p75 = scmp.eq.s32.totalorder %s17, 1
      %p76 = por %p74, %p75
      %p77 = scmp.ne.s32.totalorder %s69, %s72
      %p78 = scmp.eq.s32.totalorder %s17, 0
      %p79 = por %p77, %p78
      %p80 = scmp.ne.s32.totalorder %s69, %s72
      %p81 = scmp.eq.s32.totalorder %s22, 1
      %p82 = por %p80, %p81
      %p83 = scmp.ne.s32.totalorder %s72, %s73
      %p84 = scmp.eq.s32.totalorder %s22, 0
      %p85 = por %p83, %p84
      %p86 = scmp.ne.s32.totalorder %s72, %s73
      %p87 = scmp.eq.s32.totalorder %s23, 1
      %p88 = por %p86, %p87
      %p90 = scmp.ne.s32.totalorder %s73, %s89
      %p91 = scmp.eq.s32.totalorder %s23, 0
      %p92 = por %p90, %p91
      %s93 = ssub.s32 %s24, %s36
      %p94 = scmp.eq.s32.totalorder %s93, 0
      %s96 = sadd.s32 %s95, 1
      %s97 = scalar_select %p94, %s95, %s96
      %p100 = pneg %p94
      %p101 = scmp.eq.s32.totalorder %s17, 1
      %p102 = por %p100, %p101
      %p103 = scmp.ne.s32.totalorder %s95, %s98
      %p104 = scmp.eq.s32.totalorder %s17, 0
      %p105 = por %p103, %p104
      %p106 = scmp.ne.s32.totalorder %s95, %s98
      %p107 = scmp.eq.s32.totalorder %s22, 1
      %p108 = por %p106, %p107
      %p109 = scmp.ne.s32.totalorder %s98, %s99
      %p110 = scmp.eq.s32.totalorder %s22, 0
      %p111 = por %p109, %p110
      %p112 = scmp.ne.s32.totalorder %s98, %s99
      %p113 = scmp.eq.s32.totalorder %s23, 1
      %p114 = por %p112, %p113
      %p116 = scmp.ne.s32.totalorder %s99, %s115
      %p117 = scmp.eq.s32.totalorder %s23, 0
      %p118 = por %p116, %p117
      %p119 = scmp.le.s32.totalorder 1, %s17
      %p120 = scmp.lt.s32.totalorder %s17, 3
      %p121 = pnand %p119, %p120
      %p122 = pneg %p121
      // Predicated region
      $region9: #{tpu_custom_call.1} parent=5 // pred_check
        _
      $region10: #{tpu_custom_call.1} parent=5 // pred_check_branch
        %124 = sbr.rel (%p121) target = $region12
      $region11: #{tpu_custom_call.1} parent=5 // pred_region
        %s125 = ssub.s32 %s17, 1
      $region12: #{tpu_custom_call.1} parent=5 // pred_fallthru
        _
      %p126 = scmp.lt.s32.totalorder %s17, 2
      // Predicated region
      $region13: #{tpu_custom_call.1} parent=5 // pred_check
        %p127 = pneg %p126
      $region14: #{tpu_custom_call.1} parent=5 // pred_check_branch
        %129 = sbr.rel (%p127) target = $region16
      $region15: #{tpu_custom_call.1} parent=5 // pred_region
        // Predicated region
        $region17: #{tpu_custom_call.1} parent=15 // pred_check
          %p130 = pneg %p51
        $region18: #{tpu_custom_call.1} parent=15 // pred_check_branch
          %132 = sbr.rel (%p130) target = $region20
        $region19: #{tpu_custom_call.1} parent=15 // pred_region
          #allocation9 [shape = 'u32[6]{0}', space=smem, size = 0x18, scoped, tag = 'DMA stride descriptor']
          %s133 = sand.u32 %s41, 1
          %s134 = scalar_lea.sflag [#allocation3], %s133
          %s135 = sand.u32 %s41, 1
          %s136 = smul.addr %s135, 128
          %s137 = scalar_lea.vmem [#allocation2], %s136
          %s138 = smul.u32 16, %s25
          %s139 = ssub.s32 1, %s138
          %s140 = smul.u32 8, %s139
          %s141 = ssub.s32 128, %s140
          %s142 = sshll.u32 %s141, 4
          %143 = vsyncadd %s134, %s142
          %p144 = scmp.ne.s32.totalorder 0, %s140
          %s145 = smul.addr %s24, 4
          %s146 = sadd.s32 %s138, %s145
          %s147 = smul.addr %s146, 2
          %s148 = scalar_lea.hbm %s0, %s147
          %s149 = smul.u32 2, %s139
          %s150 = smul.u32 %s149, 4
          %s152 = sshll.u32 1, 14
          %s153 = sxor.u32 4294967295, %s152
          %s155 = sld [smem:[#allocation0]]
          %s156 = sadd.s32 2, %s155
          %s158 = sshll.u32 7, 26
          %s159 = sxor.u32 4294967295, %s158
          %s160 = sand.u32 0, %s159
          %s161 = sshll.u32 %s156, 26
          %s162 = sor.u32 %s160, %s161
          %s163 = sshll.u32 %s148, 4
          %s164 = int_to_ptr.hbm [resolvable:$true] %s163
          %s165 = sshll.u32 %s137, 4
          %s166 = int_to_ptr.vmem [resolvable:$true] %s165
          %s167 = sshll.u32 %s150, 4
          %172 = sst [smem:[#allocation9]] 32
          %s173 = scalar_lea.smem [#allocation9], 1
          %174 = sst [smem:[%s173]] 512
          %s175 = scalar_lea.smem [#allocation9], 2
          %176 = sst [smem:[%s175]] %s139
          %s177 = scalar_lea.smem [#allocation9], 3
          %178 = sst [smem:[%s177]] 32
          %s179 = scalar_lea.smem [#allocation9], 4
          %180 = sst [smem:[%s179]] 32
          %s181 = scalar_lea.smem [#allocation9], 5
          %182 = sst [smem:[%s181]] 2
          %184 = dma.general (%p144), %s164, %s167, %s166, %s134, [#allocation8], [#allocation9], %s162, 0
        $region20: #{tpu_custom_call.1} parent=15 // pred_fallthru
          _
        // Predicated region
        $region21: #{tpu_custom_call.1} parent=15 // pred_check
          %p185 = pneg %p79
        $region22: #{tpu_custom_call.1} parent=15 // pred_check_branch
          %187 = sbr.rel (%p185) target = $region24
        $region23: #{tpu_custom_call.1} parent=15 // pred_region
          %s188 = sand.u32 %s69, 1
          %s189 = scalar_lea.sflag [#allocation6], %s188
          %s190 = sand.u32 %s69, 1
          %s191 = smul.addr %s190, 32
          %s192 = scalar_lea.vmem [#allocation5], %s191
          %s193 = smul.u32 16, %s25
          %s194 = ssub.s32 1, %s193
          %s195 = smul.u32 2, %s194
          %s196 = ssub.s32 32, %s195
          %s197 = sshll.u32 %s196, 4
          %198 = vsyncadd %s189, %s197
          %p199 = scmp.ne.s32.totalorder 0, %s195
          %s200 = sadd.s32 %s193, %s24
          %s201 = smul.addr %s200, 2
          %s202 = scalar_lea.hbm %s1, %s201
          %s203 = smul.u32 2, %s194
          %s204 = sshll.u32 %s202, 4
          %s205 = int_to_ptr.hbm [resolvable:$true] %s204
          %s206 = sshll.u32 %s192, 4
          %s207 = int_to_ptr.vmem [resolvable:$true] %s206
          %s208 = sshll.u32 %s203, 4
          %212 = dma.hbm_to_vmem [thread:$0]  (%p199), %s205, %s208, %s207, %s189, 32, 32, 2
        $region24: #{tpu_custom_call.1} parent=15 // pred_fallthru
          _
      $region16: #{tpu_custom_call.1} parent=5 // pred_fallthru
        _
      %p213 = scmp.le.s32.totalorder 1, %s17
      %p214 = scmp.lt.s32.totalorder %s17, 3
      %p215 = pnand %p213, %p214
      %p216 = pneg %p215
      // Predicated region
      $region25: #{tpu_custom_call.1} parent=5 // pred_check
        _
      $region26: #{tpu_custom_call.1} parent=5 // pred_check_branch
        %218 = sbr.rel (%p215) target = $region28
      $region27: #{tpu_custom_call.1} parent=5 // pred_region
        %s219 = ssub.s32 %s17, 1
        %s220 = sand.u32 %s44, 1
        %s221 = scalar_lea.sflag [#allocation3], %s220
        %s222 = sand.u32 %s44, 1
        %s223 = smul.addr %s222, 128
        %s224 = scalar_lea.vmem [#allocation2], %s223
        // Predicated region
        $region29: #{tpu_custom_call.1} parent=27 // pred_check
          %p225 = pneg %p57
        $region30: #{tpu_custom_call.1} parent=27 // pred_check_branch
          %227 = sbr.rel (%p225) target = $region32
        $region31: #{tpu_custom_call.1} parent=27 // pred_region
          %229 = dma.done %s221, 2048
        $region32: #{tpu_custom_call.1} parent=27 // pred_fallthru
          _
        %s230 = sand.u32 %s72, 1
        %s231 = scalar_lea.sflag [#allocation6], %s230
        %s232 = sand.u32 %s72, 1
        %s233 = smul.addr %s232, 32
        %s234 = scalar_lea.vmem [#allocation5], %s233
        // Predicated region
        $region33: #{tpu_custom_call.1} parent=27 // pred_check
          %p235 = pneg %p85
        $region34: #{tpu_custom_call.1} parent=27 // pred_check_branch
          %237 = sbr.rel (%p235) target = $region36
        $region35: #{tpu_custom_call.1} parent=27 // pred_region
          %239 = dma.done %s231, 512
        $region36: #{tpu_custom_call.1} parent=27 // pred_fallthru
          _
        %s240 = sand.u32 %s44, 1
        %s241 = scalar_lea.sflag [#allocation3], %s240
        %s242 = sand.u32 %s44, 1
        %s243 = smul.addr %s242, 128
        %s244 = scalar_lea.vmem [#allocation2], %s243
        %p245 = pneg %p57
        %p246 = pneg %p54
        %s247 = sand.u32 %s72, 1
        %s248 = scalar_lea.sflag [#allocation6], %s247
        %s249 = sand.u32 %s72, 1
        %s250 = smul.addr %s249, 32
        %s251 = scalar_lea.vmem [#allocation5], %s250
        %p252 = pneg %p85
        %p253 = pneg %p82
        %p254 = pneg %p111
        %p255 = pneg %p108
        %s256 = sand.u32 %s98, 1
        %s257 = scalar_lea.sflag [#allocation4], %s256
        %s258 = sand.u32 %s98, 1
        %s259 = smul.addr %s258, 12
        %s260 = scalar_lea.vmem [#allocation7], %s259
        %s261 = smul.u32 16, %s27
        %s262 = ssub.s32 1, %s261
        %s263 = smul.u32 8, %s262
        %s264 = smul.u32 16, %s27
        %s265 = ssub.s32 1, %s264
        %s266 = smul.u32 2, %s265
        %p267 = scmp.eq.s32.totalorder %s27, 0
        // Predicated region
        $region37: #{tpu_custom_call.1} parent=27 // pred_check
          %p268 = pneg %p267
        $region38: #{tpu_custom_call.1} parent=27 // pred_check_branch
          %270 = sbr.rel (%p268) target = $region40
        $region39: #{tpu_custom_call.1} parent=27 // pred_region
          %271 = vst [vmem:[%s260] sm:$0x1] 0.0
          %272 = vst [vmem:[%s260 + $0x1] sm:$0x1] 0.0
          %273 = vst [vmem:[%s260 + $0x2] sm:$0x1] 0.0
          %274 = vst [vmem:[%s260 + $0x3] sm:$0x1] 0.0
          %275 = vst [vmem:[%s260 + $0x4] sm:$0x1] 0.0
          %276 = vst [vmem:[%s260 + $0x5] sm:$0x1] 0.0
          %277 = vst [vmem:[%s260 + $0x6] sm:$0x1] 0.0
          %278 = vst [vmem:[%s260 + $0x7] sm:$0x1] 0.0
          %279 = vst [vmem:[%s260 + $0x8] sm:$0x1] 0.0
          %280 = vst [vmem:[%s260 + $0x9] sm:$0x1] 0.0
          %281 = vst [vmem:[%s260 + $0xa] sm:$0x1] 0.0
          %282 = vst [vmem:[%s260 + $0xb] sm:$0x1] 0.0
        $region40: #{tpu_custom_call.1} parent=27 // pred_fallthru
          _
        %v283 = vld [vmem:[%s234] sm:$0xff]
        %v284 = vld [vmem:[%s234 + $0x8] sm:$0xff]
        %v285 = vld [vmem:[%s234 + $0x10] sm:$0xff]
        %v286 = vld [vmem:[%s234 + $0x18] sm:$0xff]
        %v287 = vld [vmem:[%s224] sm:$0xff]
        %v288 = vld [vmem:[%s224 + $0x8] sm:$0xff]
        %v289 = vld [vmem:[%s224 + $0x10] sm:$0xff]
        %v290 = vld [vmem:[%s224 + $0x18] sm:$0xff]
        %s291 = scalar_lea.vmem %s224, 32 [#allocation2]
        %v292 = vld [vmem:[%s291] sm:$0xff]
        %v293 = vld [vmem:[%s291 + $0x8] sm:$0xff]
        %v294 = vld [vmem:[%s291 + $0x10] sm:$0xff]
        %v295 = vld [vmem:[%s291 + $0x18] sm:$0xff]
        %s296 = scalar_lea.vmem %s224, 64 [#allocation2]
        %v297 = vld [vmem:[%s296] sm:$0xff]
        %v298 = vld [vmem:[%s296 + $0x8] sm:$0xff]
        %v299 = vld [vmem:[%s296 + $0x10] sm:$0xff]
        %v300 = vld [vmem:[%s296 + $0x18] sm:$0xff]
        %s301 = scalar_lea.vmem %s224, 96 [#allocation2]
        %v302 = vld [vmem:[%s301] sm:$0xff]
        %v303 = vld [vmem:[%s301 + $0x8] sm:$0xff]
        %v304 = vld [vmem:[%s301 + $0x10] sm:$0xff]
        %v305 = vld [vmem:[%s301 + $0x18] sm:$0xff]
        %v306 = vmax.f32 %v287, %v292
        %v307 = vmax.f32 %v288, %v293
        %v308 = vmax.f32 %v289, %v294
        %v309 = vmax.f32 %v290, %v295
        %v310 = vmax.f32 %v306, %v297
        %v311 = vmax.f32 %v307, %v298
        %v312 = vmax.f32 %v308, %v299
        %v313 = vmax.f32 %v309, %v300
        %v314 = vmax.f32 %v310, %v302
        %v315 = vmax.f32 %v311, %v303
        %v316 = vmax.f32 %v312, %v304
        %v317 = vmax.f32 %v313, %v305
        %v318 = vsub.f32 %v287, %v314
        %v319 = vsub.f32 %v288, %v315
        %v320 = vsub.f32 %v289, %v316
        %v321 = vsub.f32 %v290, %v317
        %v322 = vmul.f32 %v318, 1.442695
        %v323 = vpow.pop %v322
        %v324 = vmul.f32 %v319, 1.442695
        %v325 = vpow.pop %v324
        %v326 = vmul.f32 %v320, 1.442695
        %v327 = vpow.pop %v326
        %v328 = vmul.f32 %v321, 1.442695
        %v329 = vpow.pop %v328
        %v330 = vsub.f32 %v292, %v314
        %v331 = vsub.f32 %v293, %v315
        %v332 = vsub.f32 %v294, %v316
        %v333 = vsub.f32 %v295, %v317
        %v334 = vmul.f32 %v330, 1.442695
        %v335 = vpow.pop %v334
        %v336 = vmul.f32 %v331, 1.442695
        %v337 = vpow.pop %v336
        %v338 = vmul.f32 %v332, 1.442695
        %v339 = vpow.pop %v338
        %v340 = vmul.f32 %v333, 1.442695
        %v341 = vpow.pop %v340
        %v342 = vsub.f32 %v297, %v314
        %v343 = vsub.f32 %v298, %v315
        %v344 = vsub.f32 %v299, %v316
        %v345 = vsub.f32 %v300, %v317
        %v346 = vmul.f32 %v342, 1.442695
        %v347 = vpow.pop %v346
        %v348 = vmul.f32 %v343, 1.442695
        %v349 = vpow.pop %v348
        %v350 = vmul.f32 %v344, 1.442695
        %v351 = vpow.pop %v350
        %v352 = vmul.f32 %v345, 1.442695
        %v353 = vpow.pop %v352
        %v354 = vsub.f32 %v302, %v314
        %v355 = vsub.f32 %v303, %v315
        %v356 = vsub.f32 %v304, %v316
        %v357 = vsub.f32 %v305, %v317
        %v358 = vmul.f32 %v354, 1.442695
        %v359 = vpow.pop %v358
        %v360 = vmul.f32 %v355, 1.442695
        %v361 = vpow.pop %v360
        %v362 = vmul.f32 %v356, 1.442695
        %v363 = vpow.pop %v362
        %v364 = vmul.f32 %v357, 1.442695
        %v365 = vpow.pop %v364
        %v366 = vadd.f32 %v323, %v335
        %v367 = vadd.f32 %v325, %v337
        %v368 = vadd.f32 %v327, %v339
        %v369 = vadd.f32 %v329, %v341
        %v370 = vadd.f32 %v366, %v347
        %v371 = vadd.f32 %v367, %v349
        %v372 = vadd.f32 %v368, %v351
        %v373 = vadd.f32 %v369, %v353
        %v374 = vadd.f32 %v370, %v359
        %v375 = vadd.f32 %v371, %v361
        %v376 = vadd.f32 %v372, %v363
        %v377 = vadd.f32 %v373, %v365
        %v378 = vrcp.pop %v374
        %v379 = vrcp.pop %v375
        %v380 = vrcp.pop %v376
        %v381 = vrcp.pop %v377
        %v382 = vmul.f32 %v374, %v378
        %v383 = vmul.f32 %v375, %v379
        %v384 = vmul.f32 %v376, %v380
        %v385 = vmul.f32 %v377, %v381
        %v386 = vsub.f32 2.0, %v382
        %v387 = vsub.f32 2.0, %v383
        %v388 = vsub.f32 2.0, %v384
        %v389 = vsub.f32 2.0, %v385
        %v390 = vmul.f32 %v378, %v386
        %v391 = vmul.f32 %v379, %v387
        %v392 = vmul.f32 %v380, %v388
        %v393 = vmul.f32 %v381, %v389
        %v394 = vmul.f32 %v323, %v390
        %v395 = vmul.f32 %v325, %v391
        %v396 = vmul.f32 %v327, %v392
        %v397 = vmul.f32 %v329, %v393
        %v398 = vmul.f32 %v335, %v390
        %v399 = vmul.f32 %v337, %v391
        %v400 = vmul.f32 %v339, %v392
        %v401 = vmul.f32 %v341, %v393
        %v402 = vmul.f32 %v347, %v390
        %v403 = vmul.f32 %v349, %v391
        %v404 = vmul.f32 %v351, %v392
        %v405 = vmul.f32 %v353, %v393
        %v406 = vmul.f32 %v359, %v390
        %v407 = vmul.f32 %v361, %v391
        %v408 = vmul.f32 %v363, %v392
        %v409 = vmul.f32 %v365, %v393
        %p410 = scmp.lt.s32.totalorder %s27, 0
        // Predicated region
        $region41: #{tpu_custom_call.1} parent=27 // pred_check
          %p411 = pneg %p410
        $region42: #{tpu_custom_call.1} parent=27 // pred_check_branch
          %413 = sbr.rel (%p411) target = $region44
        $region43: #{tpu_custom_call.1} parent=27 // pred_region
          %vm414 = vcmp.eq.s32.totalorder %v283, 0
          %vm415 = vcmp.eq.s32.totalorder %v284, 0
          %vm416 = vcmp.eq.s32.totalorder %v285, 0
          %vm417 = vcmp.eq.s32.totalorder %v286, 0
          %v418 = vld [vmem:[%s260] sm:$0x1]
          %v419 = vsel %vm414, %v394, 0.0
          %v420 = vsel %vm415, %v395, 0.0
          %v421 = vsel %vm416, %v396, 0.0
          %v422 = vsel %vm417, %v397, 0.0
          %v423 = vadd.f32 %v419, %v420
          %v424 = vadd.f32 %v423, %v421
          %v425 = vadd.f32 %v424, %v422
          %v426 = vrot.slane %v425, 4
          %v427 = vadd.f32 %v425, %v426
          %v428 = vrot.slane %v427, 2
          %v429 = vadd.f32 %v427, %v428
          %v430 = vrot.slane %v429, 1
          %v431 = vadd.f32 %v429, %v430
          %v432 = vadd.f32 %v418, %v431
          %433 = vst [vmem:[%s260] sm:$0x1] %v432
          %s434 = scalar_lea.vmem %s260, 4 [#allocation7]
          %v435 = vld [vmem:[%s434] sm:$0x1]
          %v436 = vsel %vm414, 1.0, 0.0
          %v437 = vsel %vm415, 1.0, 0.0
          %v438 = vsel %vm416, 1.0, 0.0
          %v439 = vsel %vm417, 1.0, 0.0
          %v440 = vadd.f32 %v436, %v437
          %v441 = vadd.f32 %v440, %v438
          %v442 = vadd.f32 %v441, %v439
          %v443 = vrot.slane %v442, 4
          %v444 = vadd.f32 %v442, %v443
          %v445 = vrot.slane %v444, 2
          %v446 = vadd.f32 %v444, %v445
          %v447 = vrot.slane %v446, 1
          %v448 = vadd.f32 %v446, %v447
          %v449 = vadd.f32 %v435, %v448
          %450 = vst [vmem:[%s434] sm:$0x1] %v449
          %s451 = scalar_lea.vmem %s260, 8 [#allocation7]
          %v452 = vld [vmem:[%s451] sm:$0x1]
          %v453 = vadd.f32 %v394, %v395
          %v454 = vadd.f32 %v453, %v396
          %v455 = vadd.f32 %v454, %v397
          %v456 = vrot.slane %v455, 4
          %v457 = vadd.f32 %v455, %v456
          %v458 = vrot.slane %v457, 2
          %v459 = vadd.f32 %v457, %v458
          %v460 = vrot.slane %v459, 1
          %v461 = vadd.f32 %v459, %v460
          %v462 = vadd.f32 %v452, %v461
          %463 = vst [vmem:[%s451] sm:$0x1] %v462
          %vm464 = vcmp.eq.s32.totalorder %v283, 1
          %vm465 = vcmp.eq.s32.totalorder %v284, 1
          %vm466 = vcmp.eq.s32.totalorder %v285, 1
          %vm467 = vcmp.eq.s32.totalorder %v286, 1
          %s468 = scalar_lea.vmem %s260, 1 [#allocation7]
          %v469 = vld [vmem:[%s468] sm:$0x1]
          %v470 = vsel %vm464, %v398, 0.0
          %v471 = vsel %vm465, %v399, 0.0
          %v472 = vsel %vm466, %v400, 0.0
          %v473 = vsel %vm467, %v401, 0.0
          %v474 = vadd.f32 %v470, %v471
          %v475 = vadd.f32 %v474, %v472
          %v476 = vadd.f32 %v475, %v473
          %v477 = vrot.slane %v476, 4
          %v478 = vadd.f32 %v476, %v477
          %v479 = vrot.slane %v478, 2
          %v480 = vadd.f32 %v478, %v479
          %v481 = vrot.slane %v480, 1
          %v482 = vadd.f32 %v480, %v481
          %v483 = vadd.f32 %v469, %v482
          %484 = vst [vmem:[%s468] sm:$0x1] %v483
          %s485 = scalar_lea.vmem %s260, 5 [#allocation7]
          %v486 = vld [vmem:[%s485] sm:$0x1]
          %v487 = vsel %vm464, 1.0, 0.0
          %v488 = vsel %vm465, 1.0, 0.0
          %v489 = vsel %vm466, 1.0, 0.0
          %v490 = vsel %vm467, 1.0, 0.0
          %v491 = vadd.f32 %v487, %v488
          %v492 = vadd.f32 %v491, %v489
          %v493 = vadd.f32 %v492, %v490
          %v494 = vrot.slane %v493, 4
          %v495 = vadd.f32 %v493, %v494
          %v496 = vrot.slane %v495, 2
          %v497 = vadd.f32 %v495, %v496
          %v498 = vrot.slane %v497, 1
          %v499 = vadd.f32 %v497, %v498
          %v500 = vadd.f32 %v486, %v499
          %501 = vst [vmem:[%s485] sm:$0x1] %v500
          %s502 = scalar_lea.vmem %s260, 9 [#allocation7]
          %v503 = vld [vmem:[%s502] sm:$0x1]
          %v504 = vadd.f32 %v398, %v399
          %v505 = vadd.f32 %v504, %v400
          %v506 = vadd.f32 %v505, %v401
          %v507 = vrot.slane %v506, 4
          %v508 = vadd.f32 %v506, %v507
          %v509 = vrot.slane %v508, 2
          %v510 = vadd.f32 %v508, %v509
          %v511 = vrot.slane %v510, 1
          %v512 = vadd.f32 %v510, %v511
          %v513 = vadd.f32 %v503, %v512
          %514 = vst [vmem:[%s502] sm:$0x1] %v513
          %vm515 = vcmp.eq.s32.totalorder %v283, 2
          %vm516 = vcmp.eq.s32.totalorder %v284, 2
          %vm517 = vcmp.eq.s32.totalorder %v285, 2
          %vm518 = vcmp.eq.s32.totalorder %v286, 2
          %s519 = scalar_lea.vmem %s260, 2 [#allocation7]
          %v520 = vld [vmem:[%s519] sm:$0x1]
          %v521 = vsel %vm515, %v402, 0.0
          %v522 = vsel %vm516, %v403, 0.0
          %v523 = vsel %vm517, %v404, 0.0
          %v524 = vsel %vm518, %v405, 0.0
          %v525 = vadd.f32 %v521, %v522
          %v526 = vadd.f32 %v525, %v523
          %v527 = vadd.f32 %v526, %v524
          %v528 = vrot.slane %v527, 4
          %v529 = vadd.f32 %v527, %v528
          %v530 = vrot.slane %v529, 2
          %v531 = vadd.f32 %v529, %v530
          %v532 = vrot.slane %v531, 1
          %v533 = vadd.f32 %v531, %v532
          %v534 = vadd.f32 %v520, %v533
          %535 = vst [vmem:[%s519] sm:$0x1] %v534
          %s536 = scalar_lea.vmem %s260, 6 [#allocation7]
          %v537 = vld [vmem:[%s536] sm:$0x1]
          %v538 = vsel %vm515, 1.0, 0.0
          %v539 = vsel %vm516, 1.0, 0.0
          %v540 = vsel %vm517, 1.0, 0.0
          %v541 = vsel %vm518, 1.0, 0.0
          %v542 = vadd.f32 %v538, %v539
          %v543 = vadd.f32 %v542, %v540
          %v544 = vadd.f32 %v543, %v541
          %v545 = vrot.slane %v544, 4
          %v546 = vadd.f32 %v544, %v545
          %v547 = vrot.slane %v546, 2
          %v548 = vadd.f32 %v546, %v547
          %v549 = vrot.slane %v548, 1
          %v550 = vadd.f32 %v548, %v549
          %v551 = vadd.f32 %v537, %v550
          %552 = vst [vmem:[%s536] sm:$0x1] %v551
          %s553 = scalar_lea.vmem %s260, 10 [#allocation7]
          %v554 = vld [vmem:[%s553] sm:$0x1]
          %v555 = vadd.f32 %v402, %v403
          %v556 = vadd.f32 %v555, %v404
          %v557 = vadd.f32 %v556, %v405
          %v558 = vrot.slane %v557, 4
          %v559 = vadd.f32 %v557, %v558
          %v560 = vrot.slane %v559, 2
          %v561 = vadd.f32 %v559, %v560
          %v562 = vrot.slane %v561, 1
          %v563 = vadd.f32 %v561, %v562
          %v564 = vadd.f32 %v554, %v563
          %565 = vst [vmem:[%s553] sm:$0x1] %v564
          %vm566 = vcmp.eq.s32.totalorder %v283, 3
          %vm567 = vcmp.eq.s32.totalorder %v284, 3
          %vm568 = vcmp.eq.s32.totalorder %v285, 3
          %vm569 = vcmp.eq.s32.totalorder %v286, 3
          %s570 = scalar_lea.vmem %s260, 3 [#allocation7]
          %v571 = vld [vmem:[%s570] sm:$0x1]
          %v572 = vsel %vm566, %v406, 0.0
          %v573 = vsel %vm567, %v407, 0.0
          %v574 = vsel %vm568, %v408, 0.0
          %v575 = vsel %vm569, %v409, 0.0
          %v576 = vadd.f32 %v572, %v573
          %v577 = vadd.f32 %v576, %v574
          %v578 = vadd.f32 %v577, %v575
          %v579 = vrot.slane %v578, 4
          %v580 = vadd.f32 %v578, %v579
          %v581 = vrot.slane %v580, 2
          %v582 = vadd.f32 %v580, %v581
          %v583 = vrot.slane %v582, 1
          %v584 = vadd.f32 %v582, %v583
          %v585 = vadd.f32 %v571, %v584
          %586 = vst [vmem:[%s570] sm:$0x1] %v585
          %s587 = scalar_lea.vmem %s260, 7 [#allocation7]
          %v588 = vld [vmem:[%s587] sm:$0x1]
          %v589 = vsel %vm566, 1.0, 0.0
          %v590 = vsel %vm567, 1.0, 0.0
          %v591 = vsel %vm568, 1.0, 0.0
          %v592 = vsel %vm569, 1.0, 0.0
          %v593 = vadd.f32 %v589, %v590
          %v594 = vadd.f32 %v593, %v591
          %v595 = vadd.f32 %v594, %v592
          %v596 = vrot.slane %v595, 4
          %v597 = vadd.f32 %v595, %v596
          %v598 = vrot.slane %v597, 2
          %v599 = vadd.f32 %v597, %v598
          %v600 = vrot.slane %v599, 1
          %v601 = vadd.f32 %v599, %v600
          %v602 = vadd.f32 %v588, %v601
          %603 = vst [vmem:[%s587] sm:$0x1] %v602
          %s604 = scalar_lea.vmem %s260, 11 [#allocation7]
          %v605 = vld [vmem:[%s604] sm:$0x1]
          %v606 = vadd.f32 %v406, %v407
          %v607 = vadd.f32 %v606, %v408
          %v608 = vadd.f32 %v607, %v409
          %v609 = vrot.slane %v608, 4
          %v610 = vadd.f32 %v608, %v609
          %v611 = vrot.slane %v610, 2
          %v612 = vadd.f32 %v610, %v611
          %v613 = vrot.slane %v612, 1
          %v614 = vadd.f32 %v612, %v613
          %v615 = vadd.f32 %v605, %v614
          %616 = vst [vmem:[%s604] sm:$0x1] %v615
        $region44: #{tpu_custom_call.1} parent=27 // pred_fallthru
          _
        // Predicated region
        $region45: #{tpu_custom_call.1} parent=27 // pred_check
          %p617 = pneg %p267
        $region46: #{tpu_custom_call.1} parent=27 // pred_check_branch
          %619 = sbr.rel (%p617) target = $region48
        $region47: #{tpu_custom_call.1} parent=27 // pred_region
          %v620 = vlaneseq
          %v621 = vshrl.u32 %v620, 7
          %v622 = vadd.s32 %v621, 8
          %v623 = vadd.s32 %v621, 16
          %v624 = vadd.s32 %v621, 24
          %v625 = vlaneseq
          %v626 = vand.u32 %v625, 127
          %s627 = smul.u32 %s27, 4096
          %v628 = vmul.u32 %v621, 128
          %v629 = vmul.u32 %v622, 128
          %v630 = vmul.u32 %v623, 128
          %v631 = vmul.u32 %v624, 128
          %v632 = vstv %s627
          %v633 = vadd.s32 %v632, %v628
          %v634 = vadd.s32 %v632, %v629
          %v635 = vadd.s32 %v632, %v630
          %v636 = vadd.s32 %v632, %v631
          %v637 = vadd.s32 %v633, %v626
          %v638 = vadd.s32 %v634, %v626
          %v639 = vadd.s32 %v635, %v626
          %v640 = vadd.s32 %v636, %v626
          %vm641 = vcmp.lt.s32.totalorder %v637, 256
          %vm642 = vcmp.lt.s32.totalorder %v638, 256
          %vm643 = vcmp.lt.s32.totalorder %v639, 256
          %vm644 = vcmp.lt.s32.totalorder %v640, 256
          %vm645 = vcmp.eq.s32.totalorder %v283, 0
          %vm646 = vcmp.eq.s32.totalorder %v284, 0
          %vm647 = vcmp.eq.s32.totalorder %v285, 0
          %vm648 = vcmp.eq.s32.totalorder %v286, 0
          %vm649 = vmand %vm645, %vm641
          %vm650 = vmand %vm646, %vm642
          %vm651 = vmand %vm647, %vm643
          %vm652 = vmand %vm648, %vm644
          %v653 = vsel %vm641, %v394, 0.0
          %v654 = vsel %vm642, %v395, 0.0
          %v655 = vsel %vm643, %v396, 0.0
          %v656 = vsel %vm644, %v397, 0.0
          %v657 = vld [vmem:[%s260] sm:$0x1]
          %v658 = vsel %vm649, %v653, 0.0
          %v659 = vsel %vm650, %v654, 0.0
          %v660 = vsel %vm651, %v655, 0.0
          %v661 = vsel %vm652, %v656, 0.0
          %v662 = vadd.f32 %v658, %v659
          %v663 = vadd.f32 %v662, %v660
          %v664 = vadd.f32 %v663, %v661
          %v665 = vrot.slane %v664, 4
          %v666 = vadd.f32 %v664, %v665
          %v667 = vrot.slane %v666, 2
          %v668 = vadd.f32 %v666, %v667
          %v669 = vrot.slane %v668, 1
          %v670 = vadd.f32 %v668, %v669
          %v671 = vadd.f32 %v657, %v670
          %672 = vst [vmem:[%s260] sm:$0x1] %v671
          %s673 = scalar_lea.vmem %s260, 4 [#allocation7]
          %v674 = vld [vmem:[%s673] sm:$0x1]
          %v675 = vsel %vm649, 1.0, 0.0
          %v676 = vsel %vm650, 1.0, 0.0
          %v677 = vsel %vm651, 1.0, 0.0
          %v678 = vsel %vm652, 1.0, 0.0
          %v679 = vadd.f32 %v675, %v676
          %v680 = vadd.f32 %v679, %v677
          %v681 = vadd.f32 %v680, %v678
          %v682 = vrot.slane %v681, 4
          %v683 = vadd.f32 %v681, %v682
          %v684 = vrot.slane %v683, 2
          %v685 = vadd.f32 %v683, %v684
          %v686 = vrot.slane %v685, 1
          %v687 = vadd.f32 %v685, %v686
          %v688 = vadd.f32 %v674, %v687
          %689 = vst [vmem:[%s673] sm:$0x1] %v688
          %s690 = scalar_lea.vmem %s260, 8 [#allocation7]
          %v691 = vld [vmem:[%s690] sm:$0x1]
          %v692 = vadd.f32 %v653, %v654
          %v693 = vadd.f32 %v692, %v655
          %v694 = vadd.f32 %v693, %v656
          %v695 = vrot.slane %v694, 4
          %v696 = vadd.f32 %v694, %v695
          %v697 = vrot.slane %v696, 2
          %v698 = vadd.f32 %v696, %v697
          %v699 = vrot.slane %v698, 1
          %v700 = vadd.f32 %v698, %v699
          %v701 = vadd.f32 %v691, %v700
          %702 = vst [vmem:[%s690] sm:$0x1] %v701
          %vm703 = vcmp.eq.s32.totalorder %v283, 1
          %vm704 = vcmp.eq.s32.totalorder %v284, 1
          %vm705 = vcmp.eq.s32.totalorder %v285, 1
          %vm706 = vcmp.eq.s32.totalorder %v286, 1
          %vm707 = vmand %vm703, %vm641
          %vm708 = vmand %vm704, %vm642
          %vm709 = vmand %vm705, %vm643
          %vm710 = vmand %vm706, %vm644
          %v711 = vsel %vm641, %v398, 0.0
          %v712 = vsel %vm642, %v399, 0.0
          %v713 = vsel %vm643, %v400, 0.0
          %v714 = vsel %vm644, %v401, 0.0
          %s715 = scalar_lea.vmem %s260, 1 [#allocation7]
          %v716 = vld [vmem:[%s715] sm:$0x1]
          %v717 = vsel %vm707, %v711, 0.0
          %v718 = vsel %vm708, %v712, 0.0
          %v719 = vsel %vm709, %v713, 0.0
          %v720 = vsel %vm710, %v714, 0.0
          %v721 = vadd.f32 %v717, %v718
          %v722 = vadd.f32 %v721, %v719
          %v723 = vadd.f32 %v722, %v720
          %v724 = vrot.slane %v723, 4
          %v725 = vadd.f32 %v723, %v724
          %v726 = vrot.slane %v725, 2
          %v727 = vadd.f32 %v725, %v726
          %v728 = vrot.slane %v727, 1
          %v729 = vadd.f32 %v727, %v728
          %v730 = vadd.f32 %v716, %v729
          %731 = vst [vmem:[%s715] sm:$0x1] %v730
          %s732 = scalar_lea.vmem %s260, 5 [#allocation7]
          %v733 = vld [vmem:[%s732] sm:$0x1]
          %v734 = vsel %vm707, 1.0, 0.0
          %v735 = vsel %vm708, 1.0, 0.0
          %v736 = vsel %vm709, 1.0, 0.0
          %v737 = vsel %vm710, 1.0, 0.0
          %v738 = vadd.f32 %v734, %v735
          %v739 = vadd.f32 %v738, %v736
          %v740 = vadd.f32 %v739, %v737
          %v741 = vrot.slane %v740, 4
          %v742 = vadd.f32 %v740, %v741
          %v743 = vrot.slane %v742, 2
          %v744 = vadd.f32 %v742, %v743
          %v745 = vrot.slane %v744, 1
          %v746 = vadd.f32 %v744, %v745
          %v747 = vadd.f32 %v733, %v746
          %748 = vst [vmem:[%s732] sm:$0x1] %v747
          %s749 = scalar_lea.vmem %s260, 9 [#allocation7]
          %v750 = vld [vmem:[%s749] sm:$0x1]
          %v751 = vadd.f32 %v711, %v712
          %v752 = vadd.f32 %v751, %v713
          %v753 = vadd.f32 %v752, %v714
          %v754 = vrot.slane %v753, 4
          %v755 = vadd.f32 %v753, %v754
          %v756 = vrot.slane %v755, 2
          %v757 = vadd.f32 %v755, %v756
          %v758 = vrot.slane %v757, 1
          %v759 = vadd.f32 %v757, %v758
          %v760 = vadd.f32 %v750, %v759
          %761 = vst [vmem:[%s749] sm:$0x1] %v760
          %vm762 = vcmp.eq.s32.totalorder %v283, 2
          %vm763 = vcmp.eq.s32.totalorder %v284, 2
          %vm764 = vcmp.eq.s32.totalorder %v285, 2
          %vm765 = vcmp.eq.s32.totalorder %v286, 2
          %vm766 = vmand %vm762, %vm641
          %vm767 = vmand %vm763, %vm642
          %vm768 = vmand %vm764, %vm643
          %vm769 = vmand %vm765, %vm644
          %v770 = vsel %vm641, %v402, 0.0
          %v771 = vsel %vm642, %v403, 0.0
          %v772 = vsel %vm643, %v404, 0.0
          %v773 = vsel %vm644, %v405, 0.0
          %s774 = scalar_lea.vmem %s260, 2 [#allocation7]
          %v775 = vld [vmem:[%s774] sm:$0x1]
          %v776 = vsel %vm766, %v770, 0.0
          %v777 = vsel %vm767, %v771, 0.0
          %v778 = vsel %vm768, %v772, 0.0
          %v779 = vsel %vm769, %v773, 0.0
          %v780 = vadd.f32 %v776, %v777
          %v781 = vadd.f32 %v780, %v778
          %v782 = vadd.f32 %v781, %v779
          %v783 = vrot.slane %v782, 4
          %v784 = vadd.f32 %v782, %v783
          %v785 = vrot.slane %v784, 2
          %v786 = vadd.f32 %v784, %v785
          %v787 = vrot.slane %v786, 1
          %v788 = vadd.f32 %v786, %v787
          %v789 = vadd.f32 %v775, %v788
          %790 = vst [vmem:[%s774] sm:$0x1] %v789
          %s791 = scalar_lea.vmem %s260, 6 [#allocation7]
          %v792 = vld [vmem:[%s791] sm:$0x1]
          %v793 = vsel %vm766, 1.0, 0.0
          %v794 = vsel %vm767, 1.0, 0.0
          %v795 = vsel %vm768, 1.0, 0.0
          %v796 = vsel %vm769, 1.0, 0.0
          %v797 = vadd.f32 %v793, %v794
          %v798 = vadd.f32 %v797, %v795
          %v799 = vadd.f32 %v798, %v796
          %v800 = vrot.slane %v799, 4
          %v801 = vadd.f32 %v799, %v800
          %v802 = vrot.slane %v801, 2
          %v803 = vadd.f32 %v801, %v802
          %v804 = vrot.slane %v803, 1
          %v805 = vadd.f32 %v803, %v804
          %v806 = vadd.f32 %v792, %v805
          %807 = vst [vmem:[%s791] sm:$0x1] %v806
          %s808 = scalar_lea.vmem %s260, 10 [#allocation7]
          %v809 = vld [vmem:[%s808] sm:$0x1]
          %v810 = vadd.f32 %v770, %v771
          %v811 = vadd.f32 %v810, %v772
          %v812 = vadd.f32 %v811, %v773
          %v813 = vrot.slane %v812, 4
          %v814 = vadd.f32 %v812, %v813
          %v815 = vrot.slane %v814, 2
          %v816 = vadd.f32 %v814, %v815
          %v817 = vrot.slane %v816, 1
          %v818 = vadd.f32 %v816, %v817
          %v819 = vadd.f32 %v809, %v818
          %820 = vst [vmem:[%s808] sm:$0x1] %v819
          %vm821 = vcmp.eq.s32.totalorder %v283, 3
          %vm822 = vcmp.eq.s32.totalorder %v284, 3
          %vm823 = vcmp.eq.s32.totalorder %v285, 3
          %vm824 = vcmp.eq.s32.totalorder %v286, 3
          %vm825 = vmand %vm821, %vm641
          %vm826 = vmand %vm822, %vm642
          %vm827 = vmand %vm823, %vm643
          %vm828 = vmand %vm824, %vm644
          %v829 = vsel %vm641, %v406, 0.0
          %v830 = vsel %vm642, %v407, 0.0
          %v831 = vsel %vm643, %v408, 0.0
          %v832 = vsel %vm644, %v409, 0.0
          %s833 = scalar_lea.vmem %s260, 3 [#allocation7]
          %v834 = vld [vmem:[%s833] sm:$0x1]
          %v835 = vsel %vm825, %v829, 0.0
          %v836 = vsel %vm826, %v830, 0.0
          %v837 = vsel %vm827, %v831, 0.0
          %v838 = vsel %vm828, %v832, 0.0
          %v839 = vadd.f32 %v835, %v836
          %v840 = vadd.f32 %v839, %v837
          %v841 = vadd.f32 %v840, %v838
          %v842 = vrot.slane %v841, 4
          %v843 = vadd.f32 %v841, %v842
          %v844 = vrot.slane %v843, 2
          %v845 = vadd.f32 %v843, %v844
          %v846 = vrot.slane %v845, 1
          %v847 = vadd.f32 %v845, %v846
          %v848 = vadd.f32 %v834, %v847
          %849 = vst [vmem:[%s833] sm:$0x1] %v848
          %s850 = scalar_lea.vmem %s260, 7 [#allocation7]
          %v851 = vld [vmem:[%s850] sm:$0x1]
          %v852 = vsel %vm825, 1.0, 0.0
          %v853 = vsel %vm826, 1.0, 0.0
          %v854 = vsel %vm827, 1.0, 0.0
          %v855 = vsel %vm828, 1.0, 0.0
          %v856 = vadd.f32 %v852, %v853
          %v857 = vadd.f32 %v856, %v854
          %v858 = vadd.f32 %v857, %v855
          %v859 = vrot.slane %v858, 4
          %v860 = vadd.f32 %v858, %v859
          %v861 = vrot.slane %v860, 2
          %v862 = vadd.f32 %v860, %v861
          %v863 = vrot.slane %v862, 1
          %v864 = vadd.f32 %v862, %v863
          %v865 = vadd.f32 %v851, %v864
          %866 = vst [vmem:[%s850] sm:$0x1] %v865
          %s867 = scalar_lea.vmem %s260, 11 [#allocation7]
          %v868 = vld [vmem:[%s867] sm:$0x1]
          %v869 = vadd.f32 %v829, %v830
          %v870 = vadd.f32 %v869, %v831
          %v871 = vadd.f32 %v870, %v832
          %v872 = vrot.slane %v871, 4
          %v873 = vadd.f32 %v871, %v872
          %v874 = vrot.slane %v873, 2
          %v875 = vadd.f32 %v873, %v874
          %v876 = vrot.slane %v875, 1
          %v877 = vadd.f32 %v875, %v876
          %v878 = vadd.f32 %v868, %v877
          %879 = vst [vmem:[%s867] sm:$0x1] %v878
        $region48: #{tpu_custom_call.1} parent=27 // pred_fallthru
          _
        %s880 = sand.u32 %s98, 1
        %s881 = scalar_lea.sflag [#allocation4], %s880
        %s882 = sand.u32 %s98, 1
        %s883 = smul.addr %s882, 12
        %s884 = scalar_lea.vmem [#allocation7], %s883
        // Predicated region
        $region49: #{tpu_custom_call.1} parent=27 // pred_check
          %p885 = pneg %p108
        $region50: #{tpu_custom_call.1} parent=27 // pred_check_branch
          %887 = sbr.rel (%p885) target = $region52
        $region51: #{tpu_custom_call.1} parent=27 // pred_region
          %889 = vsyncadd %s881, 0
          %s890 = smul.addr %s26, 12
          %s891 = scalar_lea.hbm %s2, %s890
          %s892 = sshll.u32 %s884, 4
          %s893 = int_to_ptr.vmem [resolvable:$true] %s892
          %s894 = sshll.u32 %s891, 4
          %s895 = int_to_ptr.hbm [resolvable:$true] %s894
          %900 = dma.vmem_to_hbm [thread:$0]  %s893, 192, %s895, %s881, 16, 16, 1
        $region52: #{tpu_custom_call.1} parent=27 // pred_fallthru
          _
      $region28: #{tpu_custom_call.1} parent=5 // pred_fallthru
        _
      %p901 = scmp.le.s32.totalorder 2, %s17
      // Predicated region
      $region53: #{tpu_custom_call.1} parent=5 // pred_check
        %p902 = pneg %p901
      $region54: #{tpu_custom_call.1} parent=5 // pred_check_branch
        %904 = sbr.rel (%p902) target = $region56
      $region55: #{tpu_custom_call.1} parent=5 // pred_region
        %s905 = ssub.s32 %s17, 2
        // Predicated region
        $region57: #{tpu_custom_call.1} parent=55 // pred_check
          %p906 = pneg %p114
        $region58: #{tpu_custom_call.1} parent=55 // pred_check_branch
          %908 = sbr.rel (%p906) target = $region60
        $region59: #{tpu_custom_call.1} parent=55 // pred_region
          %s909 = sand.u32 %s99, 1
          %s910 = scalar_lea.sflag [#allocation4], %s909
          %s911 = sand.u32 %s99, 1
          %s912 = smul.addr %s911, 12
          %s913 = scalar_lea.vmem [#allocation7], %s912
          %915 = dma.done %s910, 192
        $region60: #{tpu_custom_call.1} parent=55 // pred_fallthru
          _
      $region56: #{tpu_custom_call.1} parent=5 // pred_fallthru
        _
    $region6: #{tpu_custom_call.1} parent=1 // loop_footer
      %s21 = sadd.s32 1, %s17
    $region7: #{tpu_custom_call.1} parent=1 // loop_footer_branch
      %16 = sbr.rel target = $region3
    $region8: #{tpu_custom_call.1} parent=1 // loop_exit
      _
    %916 = vsyncpa [#allocation3], 1
    %s917 = scalar_lea.sflag [#allocation3], 1
    %918 = vsyncpa %s917, 1
    %919 = vsyncpa [#allocation6], 1
    %s920 = scalar_lea.sflag [#allocation6], 1
    %921 = vsyncpa %s920, 1
    %922 = vsyncpa [#allocation4], 1
    %s923 = scalar_lea.sflag [#allocation4], 1
    %924 = vsyncpa %s923, 1

</llo_original>
